<compile_context>
chip_gen: v5e
topology: v5e:2x2
jax: 0.10.0
libtpu: 0.0.40
codegen_flags: <defaults>
</compile_context>

<pallas_src>
import jax
import jax.numpy as jnp
from jax.experimental import pallas as pl
from jax.experimental.pallas import tpu as pltpu

DIM_DATA = 2
_HIGHEST = jax.lax.Precision.HIGHEST


def _sigmoid(x):
    # sigmoid(x) == 0.5 * (tanh(0.5 * x) + 1): one EUP transcendental per element.
    return 0.5 * (jnp.tanh(0.5 * x) + 1.0)


def _mlp_kernel(xT_ref, w1T_ref, b1_ref, w2T_ref, b2_ref, oT_ref):
    # xT_ref : (2, T)  f32  -- lane-dense: N on the 128-lane axis
    # w1T_ref: (H, 2)  f32  -- fc1 weight laid out for  W1^T @ X^T
    # b1_ref : (H, 1)  f32
    # w2T_ref: (2, H)  f32  -- fc2 weight laid out for  W2^T @ H
    # b2_ref : (2, 1)  f32
    # oT_ref : (2, T)  f32
    #
    # Both H-contractions run on the MXU ("max, not sum": the MXU slot is otherwise idle,
    # so padded pushes are free filler), leaving VALU/EUP for the sigmoids only.
    pre_h = jnp.dot(w1T_ref[...], xT_ref[...],
                    precision=_HIGHEST,
                    preferred_element_type=jnp.float32) + b1_ref[...]        # (H, T)
    h = _sigmoid(pre_h)                                                       # (H, T)

    y = jnp.dot(w2T_ref[...], h,
                precision=_HIGHEST,
                preferred_element_type=jnp.float32) + b2_ref[...]            # (2, T)

    oT_ref[...] = _sigmoid(y)                                                 # one (2,T) store


def _pick_tile_n(n, hdim, *, target_tile=16384, vmem_budget_bytes=12 << 20):
    """Lane-tile size: as big as the VMEM budget allows (scales with dim_hidden),
    a multiple of 256, and small enough to keep >= 2 grid steps when N allows."""
    # Per-lane live f32 bytes: two (H, T) intermediates + double-buffered (2, T) in/out tiles.
    bytes_per_lane = (2 * hdim + 4 * DIM_DATA) * 4
    tile = min(target_tile, vmem_budget_bytes // bytes_per_lane)
    tile = max(256, (tile // 256) * 256)
    # Keep the grid >= 2 steps when possible so the "parallel" axis can shard across
    # v7x's two TensorCores (and pipeline on v5e/v6e).
    two_step = pl.cdiv(n, 2 * 256) * 256
    if two_step >= 256:
        tile = min(tile, two_step)
    return int(tile)


def my_specific_ann_forward(x, w1, b1, w2, b2, *, tile_n=None):
    """Forward pass equivalent to MySpecificANN.forward(x).

    x : any shape whose total element count is divisible by DIM_DATA (reshaped to [-1, 2]).
    w1: (DIM_DATA, H), b1: (H,), w2: (H, DIM_DATA), b2: (DIM_DATA,)   (x @ W + b convention)
    Returns: (N, DIM_DATA) float32, N = x.size // DIM_DATA.
    """
    x2d = x.reshape(-1, DIM_DATA).astype(jnp.float32)
    n = x2d.shape[0]
    hdim = w1.shape[1]
    if tile_n is None:
        tile_n = _pick_tile_n(n, hdim)

    xT = x2d.T                                                 # (2, n), lane-dense
    w1T = w1.T.astype(jnp.float32)                             # (H, 2)
    b1c = b1.reshape(hdim, 1).astype(jnp.float32)              # (H, 1)
    w2T = w2.T.astype(jnp.float32)                             # (2, H)
    b2c = b2.reshape(DIM_DATA, 1).astype(jnp.float32)          # (2, 1)

    # No jnp.pad: the (possibly ragged) tail block is masked by Pallas; the math is
    # per-lane along N, so garbage lanes cannot contaminate valid ones.
    grid = (pl.cdiv(n, tile_n),)

    outT = pl.pallas_call(
        _mlp_kernel,
        out_shape=jax.ShapeDtypeStruct((DIM_DATA, n), jnp.float32),
        grid=grid,
        in_specs=[
            pl.BlockSpec((DIM_DATA, tile_n), lambda i: (0, i)),   # xT : streamed lane tiles
            pl.BlockSpec((hdim, DIM_DATA), lambda i: (0, 0)),     # w1T: resident
            pl.BlockSpec((hdim, 1), lambda i: (0, 0)),            # b1 : resident
            pl.BlockSpec((DIM_DATA, hdim), lambda i: (0, 0)),     # w2T: resident
            pl.BlockSpec((DIM_DATA, 1), lambda i: (0, 0)),        # b2 : resident
        ],
        out_specs=pl.BlockSpec((DIM_DATA, tile_n), lambda i: (0, i)),
        compiler_params=pltpu.CompilerParams(
            dimension_semantics=("parallel",),          # megacore sharding on v7x
            vmem_limit_bytes=32 * 1024 * 1024,          # safe on v5e/v6e/v7x, > v5e 16 MiB default
        ),
        cost_estimate=pl.CostEstimate(
            flops=8 * hdim * n,
            transcendentals=(hdim + DIM_DATA) * n,
            bytes_accessed=4 * (4 * DIM_DATA * n + 2 * DIM_DATA * hdim + hdim + DIM_DATA),
        ),
    )(xT, w1T, b1c, w2T, b2c)

    return outT.T                                              # back to (N, 2)


def init_params(key, dim_hidden):
    """Deterministic init matching torch.nn.Linear default (U[-1/sqrt(fan_in), 1/sqrt(fan_in)])."""
    k1, k2, k3, k4 = jax.random.split(key, 4)
    bound1 = 1.0 / jnp.sqrt(DIM_DATA)
    bound2 = 1.0 / jnp.sqrt(dim_hidden)
    # Stored already transposed for y = x @ W + b (PyTorch stores (out, in)).
    w1 = jax.random.uniform(k1, (DIM_DATA, dim_hidden), jnp.float32, -bound1, bound1)
    b1 = jax.random.uniform(k2, (dim_hidden,), jnp.float32, -bound1, bound1)
    w2 = jax.random.uniform(k3, (dim_hidden, DIM_DATA), jnp.float32, -bound2, bound2)
    b2 = jax.random.uniform(k4, (DIM_DATA,), jnp.float32, -bound2, bound2)
    return w1, b1, w2, b2


if __name__ == "__main__":
    key = jax.random.PRNGKey(0)
    kx, kp = jax.random.split(key)

    dim_hidden = 32
    # Input of shape (2, 4, 16, 16) -> reshaped to (1024, 2) inside the forward,
    # exactly like x.reshape([-1, 2]) in the PyTorch module (exercises 2 grid tiles).
    x = jax.random.normal(kx, (2, 4, 16, 16), dtype=jnp.float32)
    w1, b1, w2, b2 = init_params(kp, dim_hidden)

    out = my_specific_ann_forward(x, w1, b1, w2, b2)
    out = jax.block_until_ready(out)

    # Reference check against plain JAX (same math as the PyTorch module).
    x2d = x.reshape(-1, DIM_DATA)
    hidden = jax.nn.sigmoid(jnp.dot(x2d, w1, precision=jax.lax.Precision.HIGHEST) + b1)
    ref = jax.nn.sigmoid(jnp.dot(hidden, w2, precision=jax.lax.Precision.HIGHEST) + b2)
    n_rows = x2d.shape[0]
    assert out.shape == (n_rows, DIM_DATA)
    assert jnp.allclose(out, ref, atol=1e-4), "mismatch vs reference"

    print("KERNEL_OK")
</pallas_src>

<mosaic_0001>
module attributes {stable_mosaic.version = 11 : i64} {
  func.func @_mlp_kernel(%arg0: i32, %arg1: memref<2x512xf32, #tpu.memory_space<vmem>>, %arg2: memref<32x2xf32, #tpu.memory_space<vmem>>, %arg3: memref<32x1xf32, #tpu.memory_space<vmem>>, %arg4: memref<2x32xf32, #tpu.memory_space<vmem>>, %arg5: memref<2x1xf32, #tpu.memory_space<vmem>>, %arg6: memref<2x512xf32, #tpu.memory_space<vmem>>) attributes {dimension_semantics = [#tpu.dimension_semantics<parallel>], iteration_bounds = array<i64: 2>, scalar_prefetch = 0 : i64, scratch_operands = 0 : i64, tpu.core_type = #tpu.core_type<tc>, window_params = [{transform_indices = @transform_0, window_bounds = array<i64: 2, 512>}, {pipeline_mode = #tpu.pipeline_mode<synchronous>, transform_indices = @transform_1, window_bounds = array<i64: 32, 2>}, {pipeline_mode = #tpu.pipeline_mode<synchronous>, transform_indices = @transform_2, window_bounds = array<i64: 32, 1>}, {pipeline_mode = #tpu.pipeline_mode<synchronous>, transform_indices = @transform_3, window_bounds = array<i64: 2, 32>}, {pipeline_mode = #tpu.pipeline_mode<synchronous>, transform_indices = @transform_4, window_bounds = array<i64: 2, 1>}, {transform_indices = @transform_5, window_bounds = array<i64: 2, 512>}]} {
    %c0 = arith.constant 0 : index
    %c0_0 = arith.constant 0 : index
    %0 = vector.load %arg2[%c0, %c0_0] : memref<32x2xf32, #tpu.memory_space<vmem>>, vector<32x2xf32>
    %c0_1 = arith.constant 0 : index
    %c0_2 = arith.constant 0 : index
    %1 = vector.load %arg1[%c0_1, %c0_2] : memref<2x512xf32, #tpu.memory_space<vmem>>, vector<2x512xf32>
    %cst = arith.constant dense<0.000000e+00> : vector<32x512xf32>
    %2 = tpu.matmul %0, %1, %cst {dimension_numbers = #tpu.dot_dimension_numbers<[1], [0], [0], [1], [0, 0, 1, 1], [], []>, precision = #tpu.contract_precision<fp32>} : vector<32x2xf32>, vector<2x512xf32>, vector<32x512xf32> -> vector<32x512xf32>
    %c0_3 = arith.constant 0 : index
    %c0_4 = arith.constant 0 : index
    %3 = vector.load %arg3[%c0_3, %c0_4] : memref<32x1xf32, #tpu.memory_space<vmem>>, vector<32x1xf32>
    %4 = vector.broadcast %3 : vector<32x1xf32> to vector<32x512xf32>
    %5 = arith.addf %2, %4 : vector<32x512xf32>
    %cst_5 = arith.constant 5.000000e-01 : f32
    %6 = vector.broadcast %cst_5 : f32 to vector<32x512xf32>
    %7 = arith.mulf %6, %5 : vector<32x512xf32>
    %8 = math.tanh %7 : vector<32x512xf32>
    %cst_6 = arith.constant 1.000000e+00 : f32
    %9 = vector.broadcast %cst_6 : f32 to vector<32x512xf32>
    %10 = arith.addf %8, %9 : vector<32x512xf32>
    %cst_7 = arith.constant 5.000000e-01 : f32
    %11 = vector.broadcast %cst_7 : f32 to vector<32x512xf32>
    %12 = arith.mulf %11, %10 : vector<32x512xf32>
    %c0_8 = arith.constant 0 : index
    %c0_9 = arith.constant 0 : index
    %13 = vector.load %arg4[%c0_8, %c0_9] : memref<2x32xf32, #tpu.memory_space<vmem>>, vector<2x32xf32>
    %cst_10 = arith.constant dense<0.000000e+00> : vector<2x512xf32>
    %14 = tpu.matmul %13, %12, %cst_10 {dimension_numbers = #tpu.dot_dimension_numbers<[1], [0], [0], [1], [0, 0, 1, 1], [], []>, precision = #tpu.contract_precision<fp32>} : vector<2x32xf32>, vector<32x512xf32>, vector<2x512xf32> -> vector<2x512xf32>
    %c0_11 = arith.constant 0 : index
    %c0_12 = arith.constant 0 : index
    %15 = vector.load %arg5[%c0_11, %c0_12] : memref<2x1xf32, #tpu.memory_space<vmem>>, vector<2x1xf32>
    %16 = vector.broadcast %15 : vector<2x1xf32> to vector<2x512xf32>
    %17 = arith.addf %14, %16 : vector<2x512xf32>
    %cst_13 = arith.constant 5.000000e-01 : f32
    %18 = vector.broadcast %cst_13 : f32 to vector<2x512xf32>
    %19 = arith.mulf %18, %17 : vector<2x512xf32>
    %20 = math.tanh %19 : vector<2x512xf32>
    %cst_14 = arith.constant 1.000000e+00 : f32
    %21 = vector.broadcast %cst_14 : f32 to vector<2x512xf32>
    %22 = arith.addf %20, %21 : vector<2x512xf32>
    %cst_15 = arith.constant 5.000000e-01 : f32
    %23 = vector.broadcast %cst_15 : f32 to vector<2x512xf32>
    %24 = arith.mulf %23, %22 : vector<2x512xf32>
    %c0_16 = arith.constant 0 : index
    %c0_17 = arith.constant 0 : index
    %25 = vector.load %arg6[%c0_16, %c0_17] : memref<2x512xf32, #tpu.memory_space<vmem>>, vector<2x512xf32>
    tpu.vector_store %arg6[%c0_16, %c0_17], %24 {strides = array<i32>} : memref<2x512xf32, #tpu.memory_space<vmem>>, vector<2x512xf32>,
    return
  }
  func.func @transform_0(%arg0: i32) -> (i32, i32) {
    %c0_i32 = arith.constant 0 : i32
    %c0_i32_0 = arith.constant 0 : i32
    return %c0_i32, %arg0 : i32, i32
  }
  func.func @transform_1(%arg0: i32) -> (i32, i32) {
    %c0_i32 = arith.constant 0 : i32
    %c0_i32_0 = arith.constant 0 : i32
    %c0_i32_1 = arith.constant 0 : i32
    return %c0_i32, %c0_i32_0 : i32, i32
  }
  func.func @transform_2(%arg0: i32) -> (i32, i32) {
    %c0_i32 = arith.constant 0 : i32
    %c0_i32_0 = arith.constant 0 : i32
    %c0_i32_1 = arith.constant 0 : i32
    return %c0_i32, %c0_i32_0 : i32, i32
  }
  func.func @transform_3(%arg0: i32) -> (i32, i32) {
    %c0_i32 = arith.constant 0 : i32
    %c0_i32_0 = arith.constant 0 : i32
    %c0_i32_1 = arith.constant 0 : i32
    return %c0_i32, %c0_i32_0 : i32, i32
  }
  func.func @transform_4(%arg0: i32) -> (i32, i32) {
    %c0_i32 = arith.constant 0 : i32
    %c0_i32_0 = arith.constant 0 : i32
    %c0_i32_1 = arith.constant 0 : i32
    return %c0_i32, %c0_i32_0 : i32, i32
  }
  func.func @transform_5(%arg0: i32) -> (i32, i32) {
    %c0_i32 = arith.constant 0 : i32
    %c0_i32_0 = arith.constant 0 : i32
    return %c0_i32, %arg0 : i32, i32
  }
}

</mosaic_0001>

<llo_original>
// kernel: tpu_custom_call.1
$region0: #{tpu_custom_call.1}
  #allocation0 [shape = 'u32[]', space=smem, size = 0x4, offset = 0x4, fixed_abs, tag = 'smem constant byte address 0x4 - core index']
  #allocation1 [shape = 'u32[72,128]{1,0:T(1,128)}', space=vmem, size = 0x9000, scoped, tag = 'internal scratch']
  %s0 = inlined_call_operand.vmem [shape: f32[2,1024], index: 0, kind: input, shape index: {}]
  %s1 = inlined_call_operand.vmem [shape: f32[32,2], index: 1, kind: input, shape index: {}]
  %s2 = inlined_call_operand.vmem [shape: f32[32,1], index: 2, kind: input, shape index: {}]
  %s3 = inlined_call_operand.vmem [shape: f32[2,32], index: 3, kind: input, shape index: {}]
  %s4 = inlined_call_operand.vmem [shape: f32[2,1], index: 4, kind: input, shape index: {}]
  %s5 = inlined_call_operand.hbm [shape: f32[2,1024], index: 5, kind: output, shape index: {}]
  %s6 = sld [smem:[#allocation0]]
  $region53: #{tpu_custom_call.1} parent=0
    _
  %s8 = ssub.s32 1, %s6
  %s9 = scalar_select 0, %s8, %s6
  $region1: #{tpu_custom_call.1} parent=0
    #allocation2 [shape = 'u8[8192]{0}', space=vmem, size = 0x2000, scoped, tag = 'output window, operand 0']
    #allocation3 [shape = 's32[2]{0}', space=sflag, size = 0x8, scoped, tag = 'scoped memory for tpu_custom_call.1']
    %10 = vsyncpa [#allocation3], 0
    %s11 = scalar_lea.sflag [#allocation3], 1
    %12 = vsyncpa %s11, 0
    loop: start=0, step=1, limit=4
    $region2: #{tpu_custom_call.1} parent=1 // loop_pre_header
      _
    $region3: #{tpu_custom_call.1} parent=1 // loop_header
      %s14 = sphi 0, %s18
      %p15 = scmp.ge.s32.totalorder %s14, 4
      %s24 = sphi 0, %s26
      %s27 = sphi 0, %s24
      %s28 = sphi 0, %s27
      %s44 = sphi 0, %s28
      %s48 = sphi 0, %s48
      %s50 = sphi 0, %s48
      %s51 = sphi 0, %s50
      %s65 = sphi 0, %s51
      %s69 = sphi 0, %s69
      %s71 = sphi 0, %s69
      %s72 = sphi 0, %s71
      %s86 = sphi 0, %s72
      %s90 = sphi 0, %s90
      %s92 = sphi 0, %s90
      %s93 = sphi 0, %s92
      %s107 = sphi 0, %s93
      %s111 = sphi 0, %s111
      %s113 = sphi 0, %s111
      %s114 = sphi 0, %s113
      %s128 = sphi 0, %s114
      %s134 = sphi 0, %s136
      %s137 = sphi 0, %s134
      %s138 = sphi 0, %s137
      %s154 = sphi 0, %s138
    $region4: #{tpu_custom_call.1} parent=1 // loop_header_branch
      %17 = sbr.rel (%p15) target = $region8
    $region5: #{tpu_custom_call.1} parent=1 // loop_body
      %s19 = ssub.s32 %s14, 1
      %s20 = ssub.s32 %s14, 2
      %s21 = sadd.s32 %s14, 1
      %s22 = ssub.s32 %s14, %s21
      %p23 = scmp.eq.s32.totalorder %s22, 0
      %s25 = sadd.s32 %s24, 1
      %s26 = scalar_select %p23, %s24, %s25
      %p29 = pneg %p23
      %p30 = scmp.eq.s32.totalorder %s14, 1
      %p31 = por %p29, %p30
      %p32 = scmp.ne.s32.totalorder %s24, %s27
      %p33 = scmp.eq.s32.totalorder %s14, 0
      %p34 = por %p32, %p33
      %p35 = scmp.ne.s32.totalorder %s24, %s27
      %p36 = scmp.eq.s32.totalorder %s19, 1
      %p37 = por %p35, %p36
      %p38 = scmp.ne.s32.totalorder %s27, %s28
      %p39 = scmp.eq.s32.totalorder %s19, 0
      %p40 = por %p38, %p39
      %p41 = scmp.ne.s32.totalorder %s27, %s28
      %p42 = scmp.eq.s32.totalorder %s20, 1
      %p43 = por %p41, %p42
      %p45 = scmp.ne.s32.totalorder %s28, %s44
      %p46 = scmp.eq.s32.totalorder %s20, 0
      %p47 = por %p45, %p46
      %s49 = sadd.s32 %s48, 1
      %p52 = scmp.eq.s32.totalorder %s14, 1
      %p53 = scmp.ne.s32.totalorder %s48, %s50
      %p54 = scmp.eq.s32.totalorder %s14, 0
      %p55 = por %p53, %p54
      %p56 = scmp.ne.s32.totalorder %s48, %s50
      %p57 = scmp.eq.s32.totalorder %s19, 1
      %p58 = por %p56, %p57
      %p59 = scmp.ne.s32.totalorder %s50, %s51
      %p60 = scmp.eq.s32.totalorder %s19, 0
      %p61 = por %p59, %p60
      %p62 = scmp.ne.s32.totalorder %s50, %s51
      %p63 = scmp.eq.s32.totalorder %s20, 1
      %p64 = por %p62, %p63
      %p66 = scmp.ne.s32.totalorder %s51, %s65
      %p67 = scmp.eq.s32.totalorder %s20, 0
      %p68 = por %p66, %p67
      %s70 = sadd.s32 %s69, 1
      %p73 = scmp.eq.s32.totalorder %s14, 1
      %p74 = scmp.ne.s32.totalorder %s69, %s71
      %p75 = scmp.eq.s32.totalorder %s14, 0
      %p76 = por %p74, %p75
      %p77 = scmp.ne.s32.totalorder %s69, %s71
      %p78 = scmp.eq.s32.totalorder %s19, 1
      %p79 = por %p77, %p78
      %p80 = scmp.ne.s32.totalorder %s71, %s72
      %p81 = scmp.eq.s32.totalorder %s19, 0
      %p82 = por %p80, %p81
      %p83 = scmp.ne.s32.totalorder %s71, %s72
      %p84 = scmp.eq.s32.totalorder %s20, 1
      %p85 = por %p83, %p84
      %p87 = scmp.ne.s32.totalorder %s72, %s86
      %p88 = scmp.eq.s32.totalorder %s20, 0
      %p89 = por %p87, %p88
      %s91 = sadd.s32 %s90, 1
      %p94 = scmp.eq.s32.totalorder %s14, 1
      %p95 = scmp.ne.s32.totalorder %s90, %s92
      %p96 = scmp.eq.s32.totalorder %s14, 0
      %p97 = por %p95, %p96
      %p98 = scmp.ne.s32.totalorder %s90, %s92
      %p99 = scmp.eq.s32.totalorder %s19, 1
      %p100 = por %p98, %p99
      %p101 = scmp.ne.s32.totalorder %s92, %s93
      %p102 = scmp.eq.s32.totalorder %s19, 0
      %p103 = por %p101, %p102
      %p104 = scmp.ne.s32.totalorder %s92, %s93
      %p105 = scmp.eq.s32.totalorder %s20, 1
      %p106 = por %p104, %p105
      %p108 = scmp.ne.s32.totalorder %s93, %s107
      %p109 = scmp.eq.s32.totalorder %s20, 0
      %p110 = por %p108, %p109
      %s112 = sadd.s32 %s111, 1
      %p115 = scmp.eq.s32.totalorder %s14, 1
      %p116 = scmp.ne.s32.totalorder %s111, %s113
      %p117 = scmp.eq.s32.totalorder %s14, 0
      %p118 = por %p116, %p117
      %p119 = scmp.ne.s32.totalorder %s111, %s113
      %p120 = scmp.eq.s32.totalorder %s19, 1
      %p121 = por %p119, %p120
      %p122 = scmp.ne.s32.totalorder %s113, %s114
      %p123 = scmp.eq.s32.totalorder %s19, 0
      %p124 = por %p122, %p123
      %p125 = scmp.ne.s32.totalorder %s113, %s114
      %p126 = scmp.eq.s32.totalorder %s20, 1
      %p127 = por %p125, %p126
      %p129 = scmp.ne.s32.totalorder %s114, %s128
      %p130 = scmp.eq.s32.totalorder %s20, 0
      %p131 = por %p129, %p130
      %s132 = ssub.s32 %s14, %s21
      %p133 = scmp.eq.s32.totalorder %s132, 0
      %s135 = sadd.s32 %s134, 1
      %s136 = scalar_select %p133, %s134, %s135
      %p139 = pneg %p133
      %p140 = scmp.eq.s32.totalorder %s14, 1
      %p141 = por %p139, %p140
      %p142 = scmp.ne.s32.totalorder %s134, %s137
      %p143 = scmp.eq.s32.totalorder %s14, 0
      %p144 = por %p142, %p143
      %p145 = scmp.ne.s32.totalorder %s134, %s137
      %p146 = scmp.eq.s32.totalorder %s19, 1
      %p147 = por %p145, %p146
      %p148 = scmp.ne.s32.totalorder %s137, %s138
      %p149 = scmp.eq.s32.totalorder %s19, 0
      %p150 = por %p148, %p149
      %p151 = scmp.ne.s32.totalorder %s137, %s138
      %p152 = scmp.eq.s32.totalorder %s20, 1
      %p153 = por %p151, %p152
      %p155 = scmp.ne.s32.totalorder %s138, %s154
      %p156 = scmp.eq.s32.totalorder %s20, 0
      %p157 = por %p155, %p156
      %p158 = scmp.le.s32.totalorder 1, %s14
      %p159 = scmp.lt.s32.totalorder %s14, 3
      %p160 = pnand %p158, %p159
      %p161 = pneg %p160
      // Predicated region
      $region9: #{tpu_custom_call.1} parent=5 // pred_check
        _
      $region10: #{tpu_custom_call.1} parent=5 // pred_check_branch
        %163 = sbr.rel (%p160) target = $region12
      $region11: #{tpu_custom_call.1} parent=5 // pred_region
        %s164 = ssub.s32 %s14, 1
        // Predicated region
        $region13: #{tpu_custom_call.1} parent=11 // pred_check
          %p165 = pneg %p61
        $region14: #{tpu_custom_call.1} parent=11 // pred_check_branch
          %167 = sbr.rel (%p165) target = $region16
        $region15: #{tpu_custom_call.1} parent=11 // pred_region
          _
        $region16: #{tpu_custom_call.1} parent=11 // pred_fallthru
          _
        // Predicated region
        $region17: #{tpu_custom_call.1} parent=11 // pred_check
          %p168 = pneg %p82
        $region18: #{tpu_custom_call.1} parent=11 // pred_check_branch
          %170 = sbr.rel (%p168) target = $region20
        $region19: #{tpu_custom_call.1} parent=11 // pred_region
          _
        $region20: #{tpu_custom_call.1} parent=11 // pred_fallthru
          _
        // Predicated region
        $region21: #{tpu_custom_call.1} parent=11 // pred_check
          %p171 = pneg %p103
        $region22: #{tpu_custom_call.1} parent=11 // pred_check_branch
          %173 = sbr.rel (%p171) target = $region24
        $region23: #{tpu_custom_call.1} parent=11 // pred_region
          _
        $region24: #{tpu_custom_call.1} parent=11 // pred_fallthru
          _
        // Predicated region
        $region25: #{tpu_custom_call.1} parent=11 // pred_check
          %p174 = pneg %p124
        $region26: #{tpu_custom_call.1} parent=11 // pred_check_branch
          %176 = sbr.rel (%p174) target = $region28
        $region27: #{tpu_custom_call.1} parent=11 // pred_region
          _
        $region28: #{tpu_custom_call.1} parent=11 // pred_fallthru
          _
      $region12: #{tpu_custom_call.1} parent=5 // pred_fallthru
        _
      %p177 = scmp.lt.s32.totalorder %s14, 2
      // Predicated region
      $region29: #{tpu_custom_call.1} parent=5 // pred_check
        %p178 = pneg %p177
      $region30: #{tpu_custom_call.1} parent=5 // pred_check_branch
        %180 = sbr.rel (%p178) target = $region32
      $region31: #{tpu_custom_call.1} parent=5 // pred_region
        // Predicated region
        $region33: #{tpu_custom_call.1} parent=31 // pred_check
          %p181 = pneg %p34
        $region34: #{tpu_custom_call.1} parent=31 // pred_check_branch
          %183 = sbr.rel (%p181) target = $region36
        $region35: #{tpu_custom_call.1} parent=31 // pred_region
          %s184 = smul.u32 4, %s14
          %p185 = scmp.lt.s32.totalorder %s184, 7
          %s186 = scalar_select %p185, %s184, 7
          %s187 = smul.addr %s186, 2
          %s188 = scalar_lea.vmem %s0, %s187
          %s189 = smul.u32 4, %s14
        $region36: #{tpu_custom_call.1} parent=31 // pred_fallthru
          _
      $region32: #{tpu_custom_call.1} parent=5 // pred_fallthru
        _
      %p190 = scmp.le.s32.totalorder 1, %s14
      %p191 = scmp.lt.s32.totalorder %s14, 3
      %p192 = pnand %p190, %p191
      %p193 = pneg %p192
      // Predicated region
      $region37: #{tpu_custom_call.1} parent=5 // pred_check
        _
      $region38: #{tpu_custom_call.1} parent=5 // pred_check_branch
        %195 = sbr.rel (%p192) target = $region40
      $region39: #{tpu_custom_call.1} parent=5 // pred_region
        %s196 = ssub.s32 %s14, 1
        %s197 = smul.u32 4, %s19
        %p198 = scmp.lt.s32.totalorder %s197, 7
        %s199 = scalar_select %p198, %s197, 7
        %s200 = smul.addr %s199, 2
        %s201 = scalar_lea.vmem %s0, %s200
        %p202 = pneg %p40
        %p203 = pneg %p37
        %p204 = pneg %p61
        %p205 = pneg %p58
        %p206 = pneg %p82
        %p207 = pneg %p79
        %p208 = pneg %p103
        %p209 = pneg %p100
        %p210 = pneg %p124
        %p211 = pneg %p121
        %p212 = pneg %p150
        %p213 = pneg %p147
        %s214 = sand.u32 %s137, 1
        %s215 = scalar_lea.sflag [#allocation3], %s214
        %s216 = sand.u32 %s137, 1
        %s217 = smul.addr %s216, 8
        %s218 = scalar_lea.vmem [#allocation2], %s217
        %s219 = smul.u32 4, %s19
        %p220 = scmp.lt.s32.totalorder %s219, 7
        %s221 = scalar_select %p220, %s219, 7
        %s222 = smul.addr %s221, 2
        %s223 = scalar_lea.vmem %s0, %s222
        %s224 = smul.u32 4, %s19
        %s225 = smul.u32 4, %s19
        %v226 = vld [vmem:[%s1] sm:$0xff]
        %v227 = vld [vmem:[%s1 + $0x8] sm:$0xff]
        %v228 = vld [vmem:[%s1 + $0x10] sm:$0xff]
        %v229 = vld [vmem:[%s1 + $0x18] sm:$0xff]
        %v230 = vld [vmem:[%s223] sm:$0xff]
        %v231 = vld [vmem:[%s2] sm:$0xff]
        %v232 = vld [vmem:[%s2 + $0x8] sm:$0xff]
        %v233 = vld [vmem:[%s2 + $0x10] sm:$0xff]
        %v234 = vld [vmem:[%s2 + $0x18] sm:$0xff]
        %236 = vset.pattern.permute.xlu0 0
        %237 = vperm.xlu0 %236, %v231
        %v238 = vpop.permute.xlu0 %237
        %241 = vset.pattern.permute.xlu0 0
        %242 = vperm.xlu0 %241, %v232
        %v243 = vpop.permute.xlu0 %242
        %246 = vset.pattern.permute.xlu0 0
        %247 = vperm.xlu0 %246, %v233
        %v248 = vpop.permute.xlu0 %247
        %251 = vset.pattern.permute.xlu0 0
        %252 = vperm.xlu0 %251, %v234
        %v253 = vpop.permute.xlu0 %252
        %256 = vst [vmem:[#allocation1] ss:$4 sm:$0xff] %v230
        %v257 = vld.sshfl [vmem:[#allocation1] sm:$0xff pattern:$0x73625140]
        %v258 = vld.sshfl [vmem:[#allocation1 + $0x8] sm:$0xff pattern:$0x73625140]
        %v259 = vld.sshfl [vmem:[#allocation1 + $0x10] sm:$0xff pattern:$0x73625140]
        %v260 = vld.sshfl [vmem:[#allocation1 + $0x18] sm:$0xff pattern:$0x73625140]
        %vm261 = vcmask 15360
        %v263 = vsel %vm261, %v226, 0
        %v266 = vsel %vm261, %v227, 0
        %v269 = vsel %vm261, %v228, 0
        %v272 = vsel %vm261, %v229, 0
        %vm274 = vcmask 1041408
        %v275 = vsel %vm274, %v257, 0
        %v277 = vsel %vm274, %v258, 0
        %v279 = vsel %vm274, %v259, 0
        %v281 = vsel %vm274, %v260, 0
        %283 = vmatpush.msra.mxu0 0.0
        %284 = vmatpush.msra.mxu0 0.0
        %285 = vmatpush.msra.mxu0 0.0
        %286 = vmatpush.msra.mxu0 0.0
        %287 = vmatpush.msra.mxu0 0.0
        %288 = vmatpush.msra.mxu0 0.0
        %289 = vmatpush.msra.mxu0 0.0
        %290 = vmatpush.msra.mxu0 0.0
        %291 = vmatpush.msra.mxu0 0.0
        %292 = vmatpush.msra.mxu0 0.0
        %293 = vmatpush.msra.mxu0 0.0
        %294 = vmatpush.msra.mxu0 0.0
        %295 = vmatpush.msra.mxu0 0.0
        %296 = vmatpush.msra.mxu0 0.0
        %297 = vmatpush.msra.mxu0 0.0
        %v298 = vand.u32 %v275, 4294901760
        %299 = vmatpush.msra.mxu0 %v298
        %v300 = vand.u32 %v263, 4294901760
        %v301 = vsub.f32 %v263, %v300
        %v302 = vand.u32 %v301, 4294901760
        %v303 = vsub.f32 %v301, %v302
        %v304 = vand.u32 %v303, 4294901760
        %305 = vmatmul.f32.gmra.mxu0 %v304
        %v306 = vpop.f32.mrf.mxu0
        %v307 = vadd.f32 %v238, %v306
        %v308 = vand.u32 %v266, 4294901760
        %v309 = vsub.f32 %v266, %v308
        %v310 = vand.u32 %v309, 4294901760
        %v311 = vsub.f32 %v309, %v310
        %v312 = vand.u32 %v311, 4294901760
        %313 = vmatmul.f32.gmra.mxu0 %v312
        %v314 = vpop.f32.mrf.mxu0
        %v315 = vadd.f32 %v243, %v314
        %v316 = vand.u32 %v269, 4294901760
        %v317 = vsub.f32 %v269, %v316
        %v318 = vand.u32 %v317, 4294901760
        %v319 = vsub.f32 %v317, %v318
        %v320 = vand.u32 %v319, 4294901760
        %321 = vmatmul.f32.gmra.mxu0 %v320
        %v322 = vpop.f32.mrf.mxu0
        %v323 = vadd.f32 %v248, %v322
        %v324 = vand.u32 %v272, 4294901760
        %v325 = vsub.f32 %v272, %v324
        %v326 = vand.u32 %v325, 4294901760
        %v327 = vsub.f32 %v325, %v326
        %v328 = vand.u32 %v327, 4294901760
        %329 = vmatmul.f32.gmra.mxu0 %v328
        %v330 = vpop.f32.mrf.mxu0
        %v331 = vadd.f32 %v253, %v330
        %332 = vdwg.mxu0
        %333 = vmatpush.msra.mxu0 0.0
        %334 = vmatpush.msra.mxu0 0.0
        %335 = vmatpush.msra.mxu0 0.0
        %336 = vmatpush.msra.mxu0 0.0
        %337 = vmatpush.msra.mxu0 0.0
        %338 = vmatpush.msra.mxu0 0.0
        %339 = vmatpush.msra.mxu0 0.0
        %340 = vmatpush.msra.mxu0 0.0
        %341 = vmatpush.msra.mxu0 0.0
        %342 = vmatpush.msra.mxu0 0.0
        %343 = vmatpush.msra.mxu0 0.0
        %344 = vmatpush.msra.mxu0 0.0
        %345 = vmatpush.msra.mxu0 0.0
        %346 = vmatpush.msra.mxu0 0.0
        %347 = vmatpush.msra.mxu0 0.0
        %v348 = vand.u32 %v275, 4294901760
        %v349 = vsub.f32 %v275, %v348
        %v350 = vand.u32 %v349, 4294901760
        %v351 = vsub.f32 %v349, %v350
        %v352 = vand.u32 %v351, 4294901760
        %353 = vmatpush.msra.mxu0 %v352
        %v354 = vand.u32 %v263, 4294901760
        %355 = vmatmul.f32.gmra.mxu0 %v354
        %v356 = vpop.f32.mrf.mxu0
        %v357 = vadd.f32 %v307, %v356
        %v358 = vand.u32 %v266, 4294901760
        %359 = vmatmul.f32.gmra.mxu0 %v358
        %v360 = vpop.f32.mrf.mxu0
        %v361 = vadd.f32 %v315, %v360
        %v362 = vand.u32 %v269, 4294901760
        %363 = vmatmul.f32.gmra.mxu0 %v362
        %v364 = vpop.f32.mrf.mxu0
        %v365 = vadd.f32 %v323, %v364
        %v366 = vand.u32 %v272, 4294901760
        %367 = vmatmul.f32.gmra.mxu0 %v366
        %v368 = vpop.f32.mrf.mxu0
        %v369 = vadd.f32 %v331, %v368
        %370 = vdwg.mxu0
        %371 = vmatpush.msra.mxu0 0.0
        %372 = vmatpush.msra.mxu0 0.0
        %373 = vmatpush.msra.mxu0 0.0
        %374 = vmatpush.msra.mxu0 0.0
        %375 = vmatpush.msra.mxu0 0.0
        %376 = vmatpush.msra.mxu0 0.0
        %377 = vmatpush.msra.mxu0 0.0
        %378 = vmatpush.msra.mxu0 0.0
        %379 = vmatpush.msra.mxu0 0.0
        %380 = vmatpush.msra.mxu0 0.0
        %381 = vmatpush.msra.mxu0 0.0
        %382 = vmatpush.msra.mxu0 0.0
        %383 = vmatpush.msra.mxu0 0.0
        %384 = vmatpush.msra.mxu0 0.0
        %385 = vmatpush.msra.mxu0 0.0
        %v386 = vand.u32 %v275, 4294901760
        %v387 = vsub.f32 %v275, %v386
        %388 = vmatpush.msra.mxu0 %v387
        %v389 = vand.u32 %v263, 4294901760
        %v390 = vsub.f32 %v263, %v389
        %391 = vmatmul.f32.gmra.mxu0 %v390
        %v392 = vpop.f32.mrf.mxu0
        %v393 = vadd.f32 %v357, %v392
        %v394 = vand.u32 %v266, 4294901760
        %v395 = vsub.f32 %v266, %v394
        %396 = vmatmul.f32.gmra.mxu0 %v395
        %v397 = vpop.f32.mrf.mxu0
        %v398 = vadd.f32 %v361, %v397
        %v399 = vand.u32 %v269, 4294901760
        %v400 = vsub.f32 %v269, %v399
        %401 = vmatmul.f32.gmra.mxu0 %v400
        %v402 = vpop.f32.mrf.mxu0
        %v403 = vadd.f32 %v365, %v402
        %v404 = vand.u32 %v272, 4294901760
        %v405 = vsub.f32 %v272, %v404
        %406 = vmatmul.f32.gmra.mxu0 %v405
        %v407 = vpop.f32.mrf.mxu0
        %v408 = vadd.f32 %v369, %v407
        %409 = vdwg.mxu0
        %410 = vmatpush.msra.mxu0 0.0
        %411 = vmatpush.msra.mxu0 0.0
        %412 = vmatpush.msra.mxu0 0.0
        %413 = vmatpush.msra.mxu0 0.0
        %414 = vmatpush.msra.mxu0 0.0
        %415 = vmatpush.msra.mxu0 0.0
        %416 = vmatpush.msra.mxu0 0.0
        %417 = vmatpush.msra.mxu0 0.0
        %418 = vmatpush.msra.mxu0 0.0
        %419 = vmatpush.msra.mxu0 0.0
        %420 = vmatpush.msra.mxu0 0.0
        %421 = vmatpush.msra.mxu0 0.0
        %422 = vmatpush.msra.mxu0 0.0
        %423 = vmatpush.msra.mxu0 0.0
        %424 = vmatpush.msra.mxu0 0.0
        %v425 = vand.u32 %v275, 4294901760
        %426 = vmatpush.msra.mxu0 %v425
        %v427 = vand.u32 %v263, 4294901760
        %v428 = vsub.f32 %v263, %v427
        %v429 = vand.u32 %v428, 4294901760
        %430 = vmatmul.f32.gmra.mxu0 %v429
        %v431 = vpop.f32.mrf.mxu0
        %v432 = vadd.f32 %v393, %v431
        %v433 = vand.u32 %v266, 4294901760
        %v434 = vsub.f32 %v266, %v433
        %v435 = vand.u32 %v434, 4294901760
        %436 = vmatmul.f32.gmra.mxu0 %v435
        %v437 = vpop.f32.mrf.mxu0
        %v438 = vadd.f32 %v398, %v437
        %v439 = vand.u32 %v269, 4294901760
        %v440 = vsub.f32 %v269, %v439
        %v441 = vand.u32 %v440, 4294901760
        %442 = vmatmul.f32.gmra.mxu0 %v441
        %v443 = vpop.f32.mrf.mxu0
        %v444 = vadd.f32 %v403, %v443
        %v445 = vand.u32 %v272, 4294901760
        %v446 = vsub.f32 %v272, %v445
        %v447 = vand.u32 %v446, 4294901760
        %448 = vmatmul.f32.gmra.mxu0 %v447
        %v449 = vpop.f32.mrf.mxu0
        %v450 = vadd.f32 %v408, %v449
        %451 = vdwg.mxu0
        %452 = vmatpush.msra.mxu0 0.0
        %453 = vmatpush.msra.mxu0 0.0
        %454 = vmatpush.msra.mxu0 0.0
        %455 = vmatpush.msra.mxu0 0.0
        %456 = vmatpush.msra.mxu0 0.0
        %457 = vmatpush.msra.mxu0 0.0
        %458 = vmatpush.msra.mxu0 0.0
        %459 = vmatpush.msra.mxu0 0.0
        %460 = vmatpush.msra.mxu0 0.0
        %461 = vmatpush.msra.mxu0 0.0
        %462 = vmatpush.msra.mxu0 0.0
        %463 = vmatpush.msra.mxu0 0.0
        %464 = vmatpush.msra.mxu0 0.0
        %465 = vmatpush.msra.mxu0 0.0
        %466 = vmatpush.msra.mxu0 0.0
        %v467 = vand.u32 %v275, 4294901760
        %v468 = vsub.f32 %v275, %v467
        %v469 = vand.u32 %v468, 4294901760
        %470 = vmatpush.msra.mxu0 %v469
        %v471 = vand.u32 %v263, 4294901760
        %472 = vmatmul.f32.gmra.mxu0 %v471
        %v473 = vpop.f32.mrf.mxu0
        %v474 = vadd.f32 %v432, %v473
        %v475 = vand.u32 %v266, 4294901760
        %476 = vmatmul.f32.gmra.mxu0 %v475
        %v477 = vpop.f32.mrf.mxu0
        %v478 = vadd.f32 %v438, %v477
        %v479 = vand.u32 %v269, 4294901760
        %480 = vmatmul.f32.gmra.mxu0 %v479
        %v481 = vpop.f32.mrf.mxu0
        %v482 = vadd.f32 %v444, %v481
        %v483 = vand.u32 %v272, 4294901760
        %484 = vmatmul.f32.gmra.mxu0 %v483
        %v485 = vpop.f32.mrf.mxu0
        %v486 = vadd.f32 %v450, %v485
        %487 = vdwg.mxu0
        %488 = vmatpush.msra.mxu0 0.0
        %489 = vmatpush.msra.mxu0 0.0
        %490 = vmatpush.msra.mxu0 0.0
        %491 = vmatpush.msra.mxu0 0.0
        %492 = vmatpush.msra.mxu0 0.0
        %493 = vmatpush.msra.mxu0 0.0
        %494 = vmatpush.msra.mxu0 0.0
        %495 = vmatpush.msra.mxu0 0.0
        %496 = vmatpush.msra.mxu0 0.0
        %497 = vmatpush.msra.mxu0 0.0
        %498 = vmatpush.msra.mxu0 0.0
        %499 = vmatpush.msra.mxu0 0.0
        %500 = vmatpush.msra.mxu0 0.0
        %501 = vmatpush.msra.mxu0 0.0
        %502 = vmatpush.msra.mxu0 0.0
        %v503 = vand.u32 %v275, 4294901760
        %504 = vmatpush.msra.mxu0 %v503
        %v505 = vand.u32 %v263, 4294901760
        %506 = vmatmul.f32.gmra.mxu0 %v505
        %v507 = vpop.f32.mrf.mxu0
        %v508 = vadd.f32 %v474, %v507
        %v509 = vand.u32 %v266, 4294901760
        %510 = vmatmul.f32.gmra.mxu0 %v509
        %v511 = vpop.f32.mrf.mxu0
        %v512 = vadd.f32 %v478, %v511
        %v513 = vand.u32 %v269, 4294901760
        %514 = vmatmul.f32.gmra.mxu0 %v513
        %v515 = vpop.f32.mrf.mxu0
        %v516 = vadd.f32 %v482, %v515
        %v517 = vand.u32 %v272, 4294901760
        %518 = vmatmul.f32.gmra.mxu0 %v517
        %v519 = vpop.f32.mrf.mxu0
        %v520 = vadd.f32 %v486, %v519
        %521 = vdwg.mxu0
        %522 = vmatpush.msra.mxu0 0.0
        %523 = vmatpush.msra.mxu0 0.0
        %524 = vmatpush.msra.mxu0 0.0
        %525 = vmatpush.msra.mxu0 0.0
        %526 = vmatpush.msra.mxu0 0.0
        %527 = vmatpush.msra.mxu0 0.0
        %528 = vmatpush.msra.mxu0 0.0
        %529 = vmatpush.msra.mxu0 0.0
        %530 = vmatpush.msra.mxu0 0.0
        %531 = vmatpush.msra.mxu0 0.0
        %532 = vmatpush.msra.mxu0 0.0
        %533 = vmatpush.msra.mxu0 0.0
        %534 = vmatpush.msra.mxu0 0.0
        %535 = vmatpush.msra.mxu0 0.0
        %536 = vmatpush.msra.mxu0 0.0
        %v537 = vand.u32 %v277, 4294901760
        %538 = vmatpush.msra.mxu0 %v537
        %v539 = vand.u32 %v263, 4294901760
        %v540 = vsub.f32 %v263, %v539
        %v541 = vand.u32 %v540, 4294901760
        %v542 = vsub.f32 %v540, %v541
        %v543 = vand.u32 %v542, 4294901760
        %544 = vmatmul.f32.gmra.mxu0 %v543
        %v545 = vpop.f32.mrf.mxu0
        %v546 = vadd.f32 %v238, %v545
        %v547 = vand.u32 %v266, 4294901760
        %v548 = vsub.f32 %v266, %v547
        %v549 = vand.u32 %v548, 4294901760
        %v550 = vsub.f32 %v548, %v549
        %v551 = vand.u32 %v550, 4294901760
        %552 = vmatmul.f32.gmra.mxu0 %v551
        %v553 = vpop.f32.mrf.mxu0
        %v554 = vadd.f32 %v243, %v553
        %v555 = vand.u32 %v269, 4294901760
        %v556 = vsub.f32 %v269, %v555
        %v557 = vand.u32 %v556, 4294901760
        %v558 = vsub.f32 %v556, %v557
        %v559 = vand.u32 %v558, 4294901760
        %560 = vmatmul.f32.gmra.mxu0 %v559
        %v561 = vpop.f32.mrf.mxu0
        %v562 = vadd.f32 %v248, %v561
        %v563 = vand.u32 %v272, 4294901760
        %v564 = vsub.f32 %v272, %v563
        %v565 = vand.u32 %v564, 4294901760
        %v566 = vsub.f32 %v564, %v565
        %v567 = vand.u32 %v566, 4294901760
        %568 = vmatmul.f32.gmra.mxu0 %v567
        %v569 = vpop.f32.mrf.mxu0
        %v570 = vadd.f32 %v253, %v569
        %571 = vdwg.mxu0
        %572 = vmatpush.msra.mxu0 0.0
        %573 = vmatpush.msra.mxu0 0.0
        %574 = vmatpush.msra.mxu0 0.0
        %575 = vmatpush.msra.mxu0 0.0
        %576 = vmatpush.msra.mxu0 0.0
        %577 = vmatpush.msra.mxu0 0.0
        %578 = vmatpush.msra.mxu0 0.0
        %579 = vmatpush.msra.mxu0 0.0
        %580 = vmatpush.msra.mxu0 0.0
        %581 = vmatpush.msra.mxu0 0.0
        %582 = vmatpush.msra.mxu0 0.0
        %583 = vmatpush.msra.mxu0 0.0
        %584 = vmatpush.msra.mxu0 0.0
        %585 = vmatpush.msra.mxu0 0.0
        %586 = vmatpush.msra.mxu0 0.0
        %v587 = vand.u32 %v277, 4294901760
        %v588 = vsub.f32 %v277, %v587
        %v589 = vand.u32 %v588, 4294901760
        %v590 = vsub.f32 %v588, %v589
        %v591 = vand.u32 %v590, 4294901760
        %592 = vmatpush.msra.mxu0 %v591
        %v593 = vand.u32 %v263, 4294901760
        %594 = vmatmul.f32.gmra.mxu0 %v593
        %v595 = vpop.f32.mrf.mxu0
        %v596 = vadd.f32 %v546, %v595
        %v597 = vand.u32 %v266, 4294901760
        %598 = vmatmul.f32.gmra.mxu0 %v597
        %v599 = vpop.f32.mrf.mxu0
        %v600 = vadd.f32 %v554, %v599
        %v601 = vand.u32 %v269, 4294901760
        %602 = vmatmul.f32.gmra.mxu0 %v601
        %v603 = vpop.f32.mrf.mxu0
        %v604 = vadd.f32 %v562, %v603
        %v605 = vand.u32 %v272, 4294901760
        %606 = vmatmul.f32.gmra.mxu0 %v605
        %v607 = vpop.f32.mrf.mxu0
        %v608 = vadd.f32 %v570, %v607
        %609 = vdwg.mxu0
        %610 = vmatpush.msra.mxu0 0.0
        %611 = vmatpush.msra.mxu0 0.0
        %612 = vmatpush.msra.mxu0 0.0
        %613 = vmatpush.msra.mxu0 0.0
        %614 = vmatpush.msra.mxu0 0.0
        %615 = vmatpush.msra.mxu0 0.0
        %616 = vmatpush.msra.mxu0 0.0
        %617 = vmatpush.msra.mxu0 0.0
        %618 = vmatpush.msra.mxu0 0.0
        %619 = vmatpush.msra.mxu0 0.0
        %620 = vmatpush.msra.mxu0 0.0
        %621 = vmatpush.msra.mxu0 0.0
        %622 = vmatpush.msra.mxu0 0.0
        %623 = vmatpush.msra.mxu0 0.0
        %624 = vmatpush.msra.mxu0 0.0
        %v625 = vand.u32 %v277, 4294901760
        %v626 = vsub.f32 %v277, %v625
        %627 = vmatpush.msra.mxu0 %v626
        %v628 = vand.u32 %v263, 4294901760
        %v629 = vsub.f32 %v263, %v628
        %630 = vmatmul.f32.gmra.mxu0 %v629
        %v631 = vpop.f32.mrf.mxu0
        %v632 = vadd.f32 %v596, %v631
        %v633 = vand.u32 %v266, 4294901760
        %v634 = vsub.f32 %v266, %v633
        %635 = vmatmul.f32.gmra.mxu0 %v634
        %v636 = vpop.f32.mrf.mxu0
        %v637 = vadd.f32 %v600, %v636
        %v638 = vand.u32 %v269, 4294901760
        %v639 = vsub.f32 %v269, %v638
        %640 = vmatmul.f32.gmra.mxu0 %v639
        %v641 = vpop.f32.mrf.mxu0
        %v642 = vadd.f32 %v604, %v641
        %v643 = vand.u32 %v272, 4294901760
        %v644 = vsub.f32 %v272, %v643
        %645 = vmatmul.f32.gmra.mxu0 %v644
        %v646 = vpop.f32.mrf.mxu0
        %v647 = vadd.f32 %v608, %v646
        %648 = vdwg.mxu0
        %649 = vmatpush.msra.mxu0 0.0
        %650 = vmatpush.msra.mxu0 0.0
        %651 = vmatpush.msra.mxu0 0.0
        %652 = vmatpush.msra.mxu0 0.0
        %653 = vmatpush.msra.mxu0 0.0
        %654 = vmatpush.msra.mxu0 0.0
        %655 = vmatpush.msra.mxu0 0.0
        %656 = vmatpush.msra.mxu0 0.0
        %657 = vmatpush.msra.mxu0 0.0
        %658 = vmatpush.msra.mxu0 0.0
        %659 = vmatpush.msra.mxu0 0.0
        %660 = vmatpush.msra.mxu0 0.0
        %661 = vmatpush.msra.mxu0 0.0
        %662 = vmatpush.msra.mxu0 0.0
        %663 = vmatpush.msra.mxu0 0.0
        %v664 = vand.u32 %v277, 4294901760
        %665 = vmatpush.msra.mxu0 %v664
        %v666 = vand.u32 %v263, 4294901760
        %v667 = vsub.f32 %v263, %v666
        %v668 = vand.u32 %v667, 4294901760
        %669 = vmatmul.f32.gmra.mxu0 %v668
        %v670 = vpop.f32.mrf.mxu0
        %v671 = vadd.f32 %v632, %v670
        %v672 = vand.u32 %v266, 4294901760
        %v673 = vsub.f32 %v266, %v672
        %v674 = vand.u32 %v673, 4294901760
        %675 = vmatmul.f32.gmra.mxu0 %v674
        %v676 = vpop.f32.mrf.mxu0
        %v677 = vadd.f32 %v637, %v676
        %v678 = vand.u32 %v269, 4294901760
        %v679 = vsub.f32 %v269, %v678
        %v680 = vand.u32 %v679, 4294901760
        %681 = vmatmul.f32.gmra.mxu0 %v680
        %v682 = vpop.f32.mrf.mxu0
        %v683 = vadd.f32 %v642, %v682
        %v684 = vand.u32 %v272, 4294901760
        %v685 = vsub.f32 %v272, %v684
        %v686 = vand.u32 %v685, 4294901760
        %687 = vmatmul.f32.gmra.mxu0 %v686
        %v688 = vpop.f32.mrf.mxu0
        %v689 = vadd.f32 %v647, %v688
        %690 = vdwg.mxu0
        %691 = vmatpush.msra.mxu0 0.0
        %692 = vmatpush.msra.mxu0 0.0
        %693 = vmatpush.msra.mxu0 0.0
        %694 = vmatpush.msra.mxu0 0.0
        %695 = vmatpush.msra.mxu0 0.0
        %696 = vmatpush.msra.mxu0 0.0
        %697 = vmatpush.msra.mxu0 0.0
        %698 = vmatpush.msra.mxu0 0.0
        %699 = vmatpush.msra.mxu0 0.0
        %700 = vmatpush.msra.mxu0 0.0
        %701 = vmatpush.msra.mxu0 0.0
        %702 = vmatpush.msra.mxu0 0.0
        %703 = vmatpush.msra.mxu0 0.0
        %704 = vmatpush.msra.mxu0 0.0
        %705 = vmatpush.msra.mxu0 0.0
        %v706 = vand.u32 %v277, 4294901760
        %v707 = vsub.f32 %v277, %v706
        %v708 = vand.u32 %v707, 4294901760
        %709 = vmatpush.msra.mxu0 %v708
        %v710 = vand.u32 %v263, 4294901760
        %711 = vmatmul.f32.gmra.mxu0 %v710
        %v712 = vpop.f32.mrf.mxu0
        %v713 = vadd.f32 %v671, %v712
        %v714 = vand.u32 %v266, 4294901760
        %715 = vmatmul.f32.gmra.mxu0 %v714
        %v716 = vpop.f32.mrf.mxu0
        %v717 = vadd.f32 %v677, %v716
        %v718 = vand.u32 %v269, 4294901760
        %719 = vmatmul.f32.gmra.mxu0 %v718
        %v720 = vpop.f32.mrf.mxu0
        %v721 = vadd.f32 %v683, %v720
        %v722 = vand.u32 %v272, 4294901760
        %723 = vmatmul.f32.gmra.mxu0 %v722
        %v724 = vpop.f32.mrf.mxu0
        %v725 = vadd.f32 %v689, %v724
        %726 = vdwg.mxu0
        %727 = vmatpush.msra.mxu0 0.0
        %728 = vmatpush.msra.mxu0 0.0
        %729 = vmatpush.msra.mxu0 0.0
        %730 = vmatpush.msra.mxu0 0.0
        %731 = vmatpush.msra.mxu0 0.0
        %732 = vmatpush.msra.mxu0 0.0
        %733 = vmatpush.msra.mxu0 0.0
        %734 = vmatpush.msra.mxu0 0.0
        %735 = vmatpush.msra.mxu0 0.0
        %736 = vmatpush.msra.mxu0 0.0
        %737 = vmatpush.msra.mxu0 0.0
        %738 = vmatpush.msra.mxu0 0.0
        %739 = vmatpush.msra.mxu0 0.0
        %740 = vmatpush.msra.mxu0 0.0
        %741 = vmatpush.msra.mxu0 0.0
        %v742 = vand.u32 %v277, 4294901760
        %743 = vmatpush.msra.mxu0 %v742
        %v744 = vand.u32 %v263, 4294901760
        %745 = vmatmul.f32.gmra.mxu0 %v744
        %v746 = vpop.f32.mrf.mxu0
        %v747 = vadd.f32 %v713, %v746
        %v748 = vand.u32 %v266, 4294901760
        %749 = vmatmul.f32.gmra.mxu0 %v748
        %v750 = vpop.f32.mrf.mxu0
        %v751 = vadd.f32 %v717, %v750
        %v752 = vand.u32 %v269, 4294901760
        %753 = vmatmul.f32.gmra.mxu0 %v752
        %v754 = vpop.f32.mrf.mxu0
        %v755 = vadd.f32 %v721, %v754
        %v756 = vand.u32 %v272, 4294901760
        %757 = vmatmul.f32.gmra.mxu0 %v756
        %v758 = vpop.f32.mrf.mxu0
        %v759 = vadd.f32 %v725, %v758
        %760 = vdwg.mxu0
        %761 = vmatpush.msra.mxu0 0.0
        %762 = vmatpush.msra.mxu0 0.0
        %763 = vmatpush.msra.mxu0 0.0
        %764 = vmatpush.msra.mxu0 0.0
        %765 = vmatpush.msra.mxu0 0.0
        %766 = vmatpush.msra.mxu0 0.0
        %767 = vmatpush.msra.mxu0 0.0
        %768 = vmatpush.msra.mxu0 0.0
        %769 = vmatpush.msra.mxu0 0.0
        %770 = vmatpush.msra.mxu0 0.0
        %771 = vmatpush.msra.mxu0 0.0
        %772 = vmatpush.msra.mxu0 0.0
        %773 = vmatpush.msra.mxu0 0.0
        %774 = vmatpush.msra.mxu0 0.0
        %775 = vmatpush.msra.mxu0 0.0
        %v776 = vand.u32 %v279, 4294901760
        %777 = vmatpush.msra.mxu0 %v776
        %v778 = vand.u32 %v263, 4294901760
        %v779 = vsub.f32 %v263, %v778
        %v780 = vand.u32 %v779, 4294901760
        %v781 = vsub.f32 %v779, %v780
        %v782 = vand.u32 %v781, 4294901760
        %783 = vmatmul.f32.gmra.mxu0 %v782
        %v784 = vpop.f32.mrf.mxu0
        %v785 = vadd.f32 %v238, %v784
        %v786 = vand.u32 %v266, 4294901760
        %v787 = vsub.f32 %v266, %v786
        %v788 = vand.u32 %v787, 4294901760
        %v789 = vsub.f32 %v787, %v788
        %v790 = vand.u32 %v789, 4294901760
        %791 = vmatmul.f32.gmra.mxu0 %v790
        %v792 = vpop.f32.mrf.mxu0
        %v793 = vadd.f32 %v243, %v792
        %v794 = vand.u32 %v269, 4294901760
        %v795 = vsub.f32 %v269, %v794
        %v796 = vand.u32 %v795, 4294901760
        %v797 = vsub.f32 %v795, %v796
        %v798 = vand.u32 %v797, 4294901760
        %799 = vmatmul.f32.gmra.mxu0 %v798
        %v800 = vpop.f32.mrf.mxu0
        %v801 = vadd.f32 %v248, %v800
        %v802 = vand.u32 %v272, 4294901760
        %v803 = vsub.f32 %v272, %v802
        %v804 = vand.u32 %v803, 4294901760
        %v805 = vsub.f32 %v803, %v804
        %v806 = vand.u32 %v805, 4294901760
        %807 = vmatmul.f32.gmra.mxu0 %v806
        %v808 = vpop.f32.mrf.mxu0
        %v809 = vadd.f32 %v253, %v808
        %810 = vdwg.mxu0
        %811 = vmatpush.msra.mxu0 0.0
        %812 = vmatpush.msra.mxu0 0.0
        %813 = vmatpush.msra.mxu0 0.0
        %814 = vmatpush.msra.mxu0 0.0
        %815 = vmatpush.msra.mxu0 0.0
        %816 = vmatpush.msra.mxu0 0.0
        %817 = vmatpush.msra.mxu0 0.0
        %818 = vmatpush.msra.mxu0 0.0
        %819 = vmatpush.msra.mxu0 0.0
        %820 = vmatpush.msra.mxu0 0.0
        %821 = vmatpush.msra.mxu0 0.0
        %822 = vmatpush.msra.mxu0 0.0
        %823 = vmatpush.msra.mxu0 0.0
        %824 = vmatpush.msra.mxu0 0.0
        %825 = vmatpush.msra.mxu0 0.0
        %v826 = vand.u32 %v279, 4294901760
        %v827 = vsub.f32 %v279, %v826
        %v828 = vand.u32 %v827, 4294901760
        %v829 = vsub.f32 %v827, %v828
        %v830 = vand.u32 %v829, 4294901760
        %831 = vmatpush.msra.mxu0 %v830
        %v832 = vand.u32 %v263, 4294901760
        %833 = vmatmul.f32.gmra.mxu0 %v832
        %v834 = vpop.f32.mrf.mxu0
        %v835 = vadd.f32 %v785, %v834
        %v836 = vand.u32 %v266, 4294901760
        %837 = vmatmul.f32.gmra.mxu0 %v836
        %v838 = vpop.f32.mrf.mxu0
        %v839 = vadd.f32 %v793, %v838
        %v840 = vand.u32 %v269, 4294901760
        %841 = vmatmul.f32.gmra.mxu0 %v840
        %v842 = vpop.f32.mrf.mxu0
        %v843 = vadd.f32 %v801, %v842
        %v844 = vand.u32 %v272, 4294901760
        %845 = vmatmul.f32.gmra.mxu0 %v844
        %v846 = vpop.f32.mrf.mxu0
        %v847 = vadd.f32 %v809, %v846
        %848 = vdwg.mxu0
        %849 = vmatpush.msra.mxu0 0.0
        %850 = vmatpush.msra.mxu0 0.0
        %851 = vmatpush.msra.mxu0 0.0
        %852 = vmatpush.msra.mxu0 0.0
        %853 = vmatpush.msra.mxu0 0.0
        %854 = vmatpush.msra.mxu0 0.0
        %855 = vmatpush.msra.mxu0 0.0
        %856 = vmatpush.msra.mxu0 0.0
        %857 = vmatpush.msra.mxu0 0.0
        %858 = vmatpush.msra.mxu0 0.0
        %859 = vmatpush.msra.mxu0 0.0
        %860 = vmatpush.msra.mxu0 0.0
        %861 = vmatpush.msra.mxu0 0.0
        %862 = vmatpush.msra.mxu0 0.0
        %863 = vmatpush.msra.mxu0 0.0
        %v864 = vand.u32 %v279, 4294901760
        %v865 = vsub.f32 %v279, %v864
        %866 = vmatpush.msra.mxu0 %v865
        %v867 = vand.u32 %v263, 4294901760
        %v868 = vsub.f32 %v263, %v867
        %869 = vmatmul.f32.gmra.mxu0 %v868
        %v870 = vpop.f32.mrf.mxu0
        %v871 = vadd.f32 %v835, %v870
        %v872 = vand.u32 %v266, 4294901760
        %v873 = vsub.f32 %v266, %v872
        %874 = vmatmul.f32.gmra.mxu0 %v873
        %v875 = vpop.f32.mrf.mxu0
        %v876 = vadd.f32 %v839, %v875
        %v877 = vand.u32 %v269, 4294901760
        %v878 = vsub.f32 %v269, %v877
        %879 = vmatmul.f32.gmra.mxu0 %v878
        %v880 = vpop.f32.mrf.mxu0
        %v881 = vadd.f32 %v843, %v880
        %v882 = vand.u32 %v272, 4294901760
        %v883 = vsub.f32 %v272, %v882
        %884 = vmatmul.f32.gmra.mxu0 %v883
        %v885 = vpop.f32.mrf.mxu0
        %v886 = vadd.f32 %v847, %v885
        %887 = vdwg.mxu0
        %888 = vmatpush.msra.mxu0 0.0
        %889 = vmatpush.msra.mxu0 0.0
        %890 = vmatpush.msra.mxu0 0.0
        %891 = vmatpush.msra.mxu0 0.0
        %892 = vmatpush.msra.mxu0 0.0
        %893 = vmatpush.msra.mxu0 0.0
        %894 = vmatpush.msra.mxu0 0.0
        %895 = vmatpush.msra.mxu0 0.0
        %896 = vmatpush.msra.mxu0 0.0
        %897 = vmatpush.msra.mxu0 0.0
        %898 = vmatpush.msra.mxu0 0.0
        %899 = vmatpush.msra.mxu0 0.0
        %900 = vmatpush.msra.mxu0 0.0
        %901 = vmatpush.msra.mxu0 0.0
        %902 = vmatpush.msra.mxu0 0.0
        %v903 = vand.u32 %v279, 4294901760
        %904 = vmatpush.msra.mxu0 %v903
        %v905 = vand.u32 %v263, 4294901760
        %v906 = vsub.f32 %v263, %v905
        %v907 = vand.u32 %v906, 4294901760
        %908 = vmatmul.f32.gmra.mxu0 %v907
        %v909 = vpop.f32.mrf.mxu0
        %v910 = vadd.f32 %v871, %v909
        %v911 = vand.u32 %v266, 4294901760
        %v912 = vsub.f32 %v266, %v911
        %v913 = vand.u32 %v912, 4294901760
        %914 = vmatmul.f32.gmra.mxu0 %v913
        %v915 = vpop.f32.mrf.mxu0
        %v916 = vadd.f32 %v876, %v915
        %v917 = vand.u32 %v269, 4294901760
        %v918 = vsub.f32 %v269, %v917
        %v919 = vand.u32 %v918, 4294901760
        %920 = vmatmul.f32.gmra.mxu0 %v919
        %v921 = vpop.f32.mrf.mxu0
        %v922 = vadd.f32 %v881, %v921
        %v923 = vand.u32 %v272, 4294901760
        %v924 = vsub.f32 %v272, %v923
        %v925 = vand.u32 %v924, 4294901760
        %926 = vmatmul.f32.gmra.mxu0 %v925
        %v927 = vpop.f32.mrf.mxu0
        %v928 = vadd.f32 %v886, %v927
        %929 = vdwg.mxu0
        %930 = vmatpush.msra.mxu0 0.0
        %931 = vmatpush.msra.mxu0 0.0
        %932 = vmatpush.msra.mxu0 0.0
        %933 = vmatpush.msra.mxu0 0.0
        %934 = vmatpush.msra.mxu0 0.0
        %935 = vmatpush.msra.mxu0 0.0
        %936 = vmatpush.msra.mxu0 0.0
        %937 = vmatpush.msra.mxu0 0.0
        %938 = vmatpush.msra.mxu0 0.0
        %939 = vmatpush.msra.mxu0 0.0
        %940 = vmatpush.msra.mxu0 0.0
        %941 = vmatpush.msra.mxu0 0.0
        %942 = vmatpush.msra.mxu0 0.0
        %943 = vmatpush.msra.mxu0 0.0
        %944 = vmatpush.msra.mxu0 0.0
        %v945 = vand.u32 %v279, 4294901760
        %v946 = vsub.f32 %v279, %v945
        %v947 = vand.u32 %v946, 4294901760
        %948 = vmatpush.msra.mxu0 %v947
        %v949 = vand.u32 %v263, 4294901760
        %950 = vmatmul.f32.gmra.mxu0 %v949
        %v951 = vpop.f32.mrf.mxu0
        %v952 = vadd.f32 %v910, %v951
        %v953 = vand.u32 %v266, 4294901760
        %954 = vmatmul.f32.gmra.mxu0 %v953
        %v955 = vpop.f32.mrf.mxu0
        %v956 = vadd.f32 %v916, %v955
        %v957 = vand.u32 %v269, 4294901760
        %958 = vmatmul.f32.gmra.mxu0 %v957
        %v959 = vpop.f32.mrf.mxu0
        %v960 = vadd.f32 %v922, %v959
        %v961 = vand.u32 %v272, 4294901760
        %962 = vmatmul.f32.gmra.mxu0 %v961
        %v963 = vpop.f32.mrf.mxu0
        %v964 = vadd.f32 %v928, %v963
        %965 = vdwg.mxu0
        %966 = vmatpush.msra.mxu0 0.0
        %967 = vmatpush.msra.mxu0 0.0
        %968 = vmatpush.msra.mxu0 0.0
        %969 = vmatpush.msra.mxu0 0.0
        %970 = vmatpush.msra.mxu0 0.0
        %971 = vmatpush.msra.mxu0 0.0
        %972 = vmatpush.msra.mxu0 0.0
        %973 = vmatpush.msra.mxu0 0.0
        %974 = vmatpush.msra.mxu0 0.0
        %975 = vmatpush.msra.mxu0 0.0
        %976 = vmatpush.msra.mxu0 0.0
        %977 = vmatpush.msra.mxu0 0.0
        %978 = vmatpush.msra.mxu0 0.0
        %979 = vmatpush.msra.mxu0 0.0
        %980 = vmatpush.msra.mxu0 0.0
        %v981 = vand.u32 %v279, 4294901760
        %982 = vmatpush.msra.mxu0 %v981
        %v983 = vand.u32 %v263, 4294901760
        %984 = vmatmul.f32.gmra.mxu0 %v983
        %v985 = vpop.f32.mrf.mxu0
        %v986 = vadd.f32 %v952, %v985
        %v987 = vand.u32 %v266, 4294901760
        %988 = vmatmul.f32.gmra.mxu0 %v987
        %v989 = vpop.f32.mrf.mxu0
        %v990 = vadd.f32 %v956, %v989
        %v991 = vand.u32 %v269, 4294901760
        %992 = vmatmul.f32.gmra.mxu0 %v991
        %v993 = vpop.f32.mrf.mxu0
        %v994 = vadd.f32 %v960, %v993
        %v995 = vand.u32 %v272, 4294901760
        %996 = vmatmul.f32.gmra.mxu0 %v995
        %v997 = vpop.f32.mrf.mxu0
        %v998 = vadd.f32 %v964, %v997
        %999 = vdwg.mxu0
        %1000 = vmatpush.msra.mxu0 0.0
        %1001 = vmatpush.msra.mxu0 0.0
        %1002 = vmatpush.msra.mxu0 0.0
        %1003 = vmatpush.msra.mxu0 0.0
        %1004 = vmatpush.msra.mxu0 0.0
        %1005 = vmatpush.msra.mxu0 0.0
        %1006 = vmatpush.msra.mxu0 0.0
        %1007 = vmatpush.msra.mxu0 0.0
        %1008 = vmatpush.msra.mxu0 0.0
        %1009 = vmatpush.msra.mxu0 0.0
        %1010 = vmatpush.msra.mxu0 0.0
        %1011 = vmatpush.msra.mxu0 0.0
        %1012 = vmatpush.msra.mxu0 0.0
        %1013 = vmatpush.msra.mxu0 0.0
        %1014 = vmatpush.msra.mxu0 0.0
        %v1015 = vand.u32 %v281, 4294901760
        %1016 = vmatpush.msra.mxu0 %v1015
        %v1017 = vand.u32 %v263, 4294901760
        %v1018 = vsub.f32 %v263, %v1017
        %v1019 = vand.u32 %v1018, 4294901760
        %v1020 = vsub.f32 %v1018, %v1019
        %v1021 = vand.u32 %v1020, 4294901760
        %1022 = vmatmul.f32.gmra.mxu0 %v1021
        %v1023 = vpop.f32.mrf.mxu0
        %v1024 = vadd.f32 %v238, %v1023
        %v1025 = vand.u32 %v266, 4294901760
        %v1026 = vsub.f32 %v266, %v1025
        %v1027 = vand.u32 %v1026, 4294901760
        %v1028 = vsub.f32 %v1026, %v1027
        %v1029 = vand.u32 %v1028, 4294901760
        %1030 = vmatmul.f32.gmra.mxu0 %v1029
        %v1031 = vpop.f32.mrf.mxu0
        %v1032 = vadd.f32 %v243, %v1031
        %v1033 = vand.u32 %v269, 4294901760
        %v1034 = vsub.f32 %v269, %v1033
        %v1035 = vand.u32 %v1034, 4294901760
        %v1036 = vsub.f32 %v1034, %v1035
        %v1037 = vand.u32 %v1036, 4294901760
        %1038 = vmatmul.f32.gmra.mxu0 %v1037
        %v1039 = vpop.f32.mrf.mxu0
        %v1040 = vadd.f32 %v248, %v1039
        %v1041 = vand.u32 %v272, 4294901760
        %v1042 = vsub.f32 %v272, %v1041
        %v1043 = vand.u32 %v1042, 4294901760
        %v1044 = vsub.f32 %v1042, %v1043
        %v1045 = vand.u32 %v1044, 4294901760
        %1046 = vmatmul.f32.gmra.mxu0 %v1045
        %v1047 = vpop.f32.mrf.mxu0
        %v1048 = vadd.f32 %v253, %v1047
        %1049 = vdwg.mxu0
        %1050 = vmatpush.msra.mxu0 0.0
        %1051 = vmatpush.msra.mxu0 0.0
        %1052 = vmatpush.msra.mxu0 0.0
        %1053 = vmatpush.msra.mxu0 0.0
        %1054 = vmatpush.msra.mxu0 0.0
        %1055 = vmatpush.msra.mxu0 0.0
        %1056 = vmatpush.msra.mxu0 0.0
        %1057 = vmatpush.msra.mxu0 0.0
        %1058 = vmatpush.msra.mxu0 0.0
        %1059 = vmatpush.msra.mxu0 0.0
        %1060 = vmatpush.msra.mxu0 0.0
        %1061 = vmatpush.msra.mxu0 0.0
        %1062 = vmatpush.msra.mxu0 0.0
        %1063 = vmatpush.msra.mxu0 0.0
        %1064 = vmatpush.msra.mxu0 0.0
        %v1065 = vand.u32 %v281, 4294901760
        %v1066 = vsub.f32 %v281, %v1065
        %v1067 = vand.u32 %v1066, 4294901760
        %v1068 = vsub.f32 %v1066, %v1067
        %v1069 = vand.u32 %v1068, 4294901760
        %1070 = vmatpush.msra.mxu0 %v1069
        %v1071 = vand.u32 %v263, 4294901760
        %1072 = vmatmul.f32.gmra.mxu0 %v1071
        %v1073 = vpop.f32.mrf.mxu0
        %v1074 = vadd.f32 %v1024, %v1073
        %v1075 = vand.u32 %v266, 4294901760
        %1076 = vmatmul.f32.gmra.mxu0 %v1075
        %v1077 = vpop.f32.mrf.mxu0
        %v1078 = vadd.f32 %v1032, %v1077
        %v1079 = vand.u32 %v269, 4294901760
        %1080 = vmatmul.f32.gmra.mxu0 %v1079
        %v1081 = vpop.f32.mrf.mxu0
        %v1082 = vadd.f32 %v1040, %v1081
        %v1083 = vand.u32 %v272, 4294901760
        %1084 = vmatmul.f32.gmra.mxu0 %v1083
        %v1085 = vpop.f32.mrf.mxu0
        %v1086 = vadd.f32 %v1048, %v1085
        %1087 = vdwg.mxu0
        %1088 = vmatpush.msra.mxu0 0.0
        %1089 = vmatpush.msra.mxu0 0.0
        %1090 = vmatpush.msra.mxu0 0.0
        %1091 = vmatpush.msra.mxu0 0.0
        %1092 = vmatpush.msra.mxu0 0.0
        %1093 = vmatpush.msra.mxu0 0.0
        %1094 = vmatpush.msra.mxu0 0.0
        %1095 = vmatpush.msra.mxu0 0.0
        %1096 = vmatpush.msra.mxu0 0.0
        %1097 = vmatpush.msra.mxu0 0.0
        %1098 = vmatpush.msra.mxu0 0.0
        %1099 = vmatpush.msra.mxu0 0.0
        %1100 = vmatpush.msra.mxu0 0.0
        %1101 = vmatpush.msra.mxu0 0.0
        %1102 = vmatpush.msra.mxu0 0.0
        %v1103 = vand.u32 %v281, 4294901760
        %v1104 = vsub.f32 %v281, %v1103
        %1105 = vmatpush.msra.mxu0 %v1104
        %v1106 = vand.u32 %v263, 4294901760
        %v1107 = vsub.f32 %v263, %v1106
        %1108 = vmatmul.f32.gmra.mxu0 %v1107
        %v1109 = vpop.f32.mrf.mxu0
        %v1110 = vadd.f32 %v1074, %v1109
        %v1111 = vand.u32 %v266, 4294901760
        %v1112 = vsub.f32 %v266, %v1111
        %1113 = vmatmul.f32.gmra.mxu0 %v1112
        %v1114 = vpop.f32.mrf.mxu0
        %v1115 = vadd.f32 %v1078, %v1114
        %v1116 = vand.u32 %v269, 4294901760
        %v1117 = vsub.f32 %v269, %v1116
        %1118 = vmatmul.f32.gmra.mxu0 %v1117
        %v1119 = vpop.f32.mrf.mxu0
        %v1120 = vadd.f32 %v1082, %v1119
        %v1121 = vand.u32 %v272, 4294901760
        %v1122 = vsub.f32 %v272, %v1121
        %1123 = vmatmul.f32.gmra.mxu0 %v1122
        %v1124 = vpop.f32.mrf.mxu0
        %v1125 = vadd.f32 %v1086, %v1124
        %1126 = vdwg.mxu0
        %1127 = vmatpush.msra.mxu0 0.0
        %1128 = vmatpush.msra.mxu0 0.0
        %1129 = vmatpush.msra.mxu0 0.0
        %1130 = vmatpush.msra.mxu0 0.0
        %1131 = vmatpush.msra.mxu0 0.0
        %1132 = vmatpush.msra.mxu0 0.0
        %1133 = vmatpush.msra.mxu0 0.0
        %1134 = vmatpush.msra.mxu0 0.0
        %1135 = vmatpush.msra.mxu0 0.0
        %1136 = vmatpush.msra.mxu0 0.0
        %1137 = vmatpush.msra.mxu0 0.0
        %1138 = vmatpush.msra.mxu0 0.0
        %1139 = vmatpush.msra.mxu0 0.0
        %1140 = vmatpush.msra.mxu0 0.0
        %1141 = vmatpush.msra.mxu0 0.0
        %v1142 = vand.u32 %v281, 4294901760
        %1143 = vmatpush.msra.mxu0 %v1142
        %v1144 = vand.u32 %v263, 4294901760
        %v1145 = vsub.f32 %v263, %v1144
        %v1146 = vand.u32 %v1145, 4294901760
        %1147 = vmatmul.f32.gmra.mxu0 %v1146
        %v1148 = vpop.f32.mrf.mxu0
        %v1149 = vadd.f32 %v1110, %v1148
        %v1150 = vand.u32 %v266, 4294901760
        %v1151 = vsub.f32 %v266, %v1150
        %v1152 = vand.u32 %v1151, 4294901760
        %1153 = vmatmul.f32.gmra.mxu0 %v1152
        %v1154 = vpop.f32.mrf.mxu0
        %v1155 = vadd.f32 %v1115, %v1154
        %v1156 = vand.u32 %v269, 4294901760
        %v1157 = vsub.f32 %v269, %v1156
        %v1158 = vand.u32 %v1157, 4294901760
        %1159 = vmatmul.f32.gmra.mxu0 %v1158
        %v1160 = vpop.f32.mrf.mxu0
        %v1161 = vadd.f32 %v1120, %v1160
        %v1162 = vand.u32 %v272, 4294901760
        %v1163 = vsub.f32 %v272, %v1162
        %v1164 = vand.u32 %v1163, 4294901760
        %1165 = vmatmul.f32.gmra.mxu0 %v1164
        %v1166 = vpop.f32.mrf.mxu0
        %v1167 = vadd.f32 %v1125, %v1166
        %1168 = vdwg.mxu0
        %1169 = vmatpush.msra.mxu0 0.0
        %1170 = vmatpush.msra.mxu0 0.0
        %1171 = vmatpush.msra.mxu0 0.0
        %1172 = vmatpush.msra.mxu0 0.0
        %1173 = vmatpush.msra.mxu0 0.0
        %1174 = vmatpush.msra.mxu0 0.0
        %1175 = vmatpush.msra.mxu0 0.0
        %1176 = vmatpush.msra.mxu0 0.0
        %1177 = vmatpush.msra.mxu0 0.0
        %1178 = vmatpush.msra.mxu0 0.0
        %1179 = vmatpush.msra.mxu0 0.0
        %1180 = vmatpush.msra.mxu0 0.0
        %1181 = vmatpush.msra.mxu0 0.0
        %1182 = vmatpush.msra.mxu0 0.0
        %1183 = vmatpush.msra.mxu0 0.0
        %v1184 = vand.u32 %v281, 4294901760
        %v1185 = vsub.f32 %v281, %v1184
        %v1186 = vand.u32 %v1185, 4294901760
        %1187 = vmatpush.msra.mxu0 %v1186
        %v1188 = vand.u32 %v263, 4294901760
        %1189 = vmatmul.f32.gmra.mxu0 %v1188
        %v1190 = vpop.f32.mrf.mxu0
        %v1191 = vadd.f32 %v1149, %v1190
        %v1192 = vand.u32 %v266, 4294901760
        %1193 = vmatmul.f32.gmra.mxu0 %v1192
        %v1194 = vpop.f32.mrf.mxu0
        %v1195 = vadd.f32 %v1155, %v1194
        %v1196 = vand.u32 %v269, 4294901760
        %1197 = vmatmul.f32.gmra.mxu0 %v1196
        %v1198 = vpop.f32.mrf.mxu0
        %v1199 = vadd.f32 %v1161, %v1198
        %v1200 = vand.u32 %v272, 4294901760
        %1201 = vmatmul.f32.gmra.mxu0 %v1200
        %v1202 = vpop.f32.mrf.mxu0
        %v1203 = vadd.f32 %v1167, %v1202
        %1204 = vdwg.mxu0
        %1205 = vmatpush.msra.mxu0 0.0
        %1206 = vmatpush.msra.mxu0 0.0
        %1207 = vmatpush.msra.mxu0 0.0
        %1208 = vmatpush.msra.mxu0 0.0
        %1209 = vmatpush.msra.mxu0 0.0
        %1210 = vmatpush.msra.mxu0 0.0
        %1211 = vmatpush.msra.mxu0 0.0
        %1212 = vmatpush.msra.mxu0 0.0
        %1213 = vmatpush.msra.mxu0 0.0
        %1214 = vmatpush.msra.mxu0 0.0
        %1215 = vmatpush.msra.mxu0 0.0
        %1216 = vmatpush.msra.mxu0 0.0
        %1217 = vmatpush.msra.mxu0 0.0
        %1218 = vmatpush.msra.mxu0 0.0
        %1219 = vmatpush.msra.mxu0 0.0
        %v1220 = vand.u32 %v281, 4294901760
        %1221 = vmatpush.msra.mxu0 %v1220
        %v1222 = vand.u32 %v263, 4294901760
        %1223 = vmatmul.f32.gmra.mxu0 %v1222
        %v1224 = vpop.f32.mrf.mxu0
        %v1225 = vadd.f32 %v1191, %v1224
        %v1226 = vand.u32 %v266, 4294901760
        %1227 = vmatmul.f32.gmra.mxu0 %v1226
        %v1228 = vpop.f32.mrf.mxu0
        %v1229 = vadd.f32 %v1195, %v1228
        %v1230 = vand.u32 %v269, 4294901760
        %1231 = vmatmul.f32.gmra.mxu0 %v1230
        %v1232 = vpop.f32.mrf.mxu0
        %v1233 = vadd.f32 %v1199, %v1232
        %v1234 = vand.u32 %v272, 4294901760
        %1235 = vmatmul.f32.gmra.mxu0 %v1234
        %v1236 = vpop.f32.mrf.mxu0
        %v1237 = vadd.f32 %v1203, %v1236
        %1238 = vdwg.mxu0
        %v1239 = vmul.f32 %v508, 0.5
        %v1240 = vmul.f32 %v747, 0.5
        %v1241 = vmul.f32 %v986, 0.5
        %v1242 = vmul.f32 %v1225, 0.5
        %v1243 = vmul.f32 %v512, 0.5
        %v1244 = vmul.f32 %v751, 0.5
        %v1245 = vmul.f32 %v990, 0.5
        %v1246 = vmul.f32 %v1229, 0.5
        %v1247 = vmul.f32 %v516, 0.5
        %v1248 = vmul.f32 %v755, 0.5
        %v1249 = vmul.f32 %v994, 0.5
        %v1250 = vmul.f32 %v1233, 0.5
        %v1251 = vmul.f32 %v520, 0.5
        %v1252 = vmul.f32 %v759, 0.5
        %v1253 = vmul.f32 %v998, 0.5
        %v1254 = vmul.f32 %v1237, 0.5
        %v1255 = vtanh.pop %v1239
        %v1256 = vtanh.pop %v1240
        %v1257 = vtanh.pop %v1241
        %v1258 = vtanh.pop %v1242
        %v1259 = vtanh.pop %v1243
        %v1260 = vtanh.pop %v1244
        %v1261 = vtanh.pop %v1245
        %v1262 = vtanh.pop %v1246
        %v1263 = vtanh.pop %v1247
        %v1264 = vtanh.pop %v1248
        %v1265 = vtanh.pop %v1249
        %v1266 = vtanh.pop %v1250
        %v1267 = vtanh.pop %v1251
        %v1268 = vtanh.pop %v1252
        %v1269 = vtanh.pop %v1253
        %v1270 = vtanh.pop %v1254
        %v1271 = vadd.f32 %v1255, 1.0
        %v1272 = vadd.f32 %v1256, 1.0
        %v1273 = vadd.f32 %v1257, 1.0
        %v1274 = vadd.f32 %v1258, 1.0
        %v1275 = vadd.f32 %v1259, 1.0
        %v1276 = vadd.f32 %v1260, 1.0
        %v1277 = vadd.f32 %v1261, 1.0
        %v1278 = vadd.f32 %v1262, 1.0
        %v1279 = vadd.f32 %v1263, 1.0
        %v1280 = vadd.f32 %v1264, 1.0
        %v1281 = vadd.f32 %v1265, 1.0
        %v1282 = vadd.f32 %v1266, 1.0
        %v1283 = vadd.f32 %v1267, 1.0
        %v1284 = vadd.f32 %v1268, 1.0
        %v1285 = vadd.f32 %v1269, 1.0
        %v1286 = vadd.f32 %v1270, 1.0
        %v1287 = vmul.f32 %v1271, 0.5
        %v1288 = vmul.f32 %v1272, 0.5
        %v1289 = vmul.f32 %v1273, 0.5
        %v1290 = vmul.f32 %v1274, 0.5
        %v1291 = vmul.f32 %v1275, 0.5
        %v1292 = vmul.f32 %v1276, 0.5
        %v1293 = vmul.f32 %v1277, 0.5
        %v1294 = vmul.f32 %v1278, 0.5
        %v1295 = vmul.f32 %v1279, 0.5
        %v1296 = vmul.f32 %v1280, 0.5
        %v1297 = vmul.f32 %v1281, 0.5
        %v1298 = vmul.f32 %v1282, 0.5
        %v1299 = vmul.f32 %v1283, 0.5
        %v1300 = vmul.f32 %v1284, 0.5
        %v1301 = vmul.f32 %v1285, 0.5
        %v1302 = vmul.f32 %v1286, 0.5
        %v1303 = vld [vmem:[%s3] sm:$0x3]
        %v1304 = vld [vmem:[%s4] sm:$0x3]
        %1306 = vset.pattern.permute.xlu0 0
        %1307 = vperm.xlu0 %1306, %v1304
        %v1308 = vpop.permute.xlu0 %1307
        %vm1310 = vcmask 261120
        %v1312 = vsel %vm1310, %v1303, 0
        %1314 = vmatpush.msra.mxu0 0.0
        %1315 = vmatpush.msra.mxu0 0.0
        %1316 = vmatpush.msra.mxu0 0.0
        %1317 = vmatpush.msra.mxu0 0.0
        %1318 = vmatpush.msra.mxu0 0.0
        %1319 = vmatpush.msra.mxu0 0.0
        %1320 = vmatpush.msra.mxu0 0.0
        %1321 = vmatpush.msra.mxu0 0.0
        %1322 = vmatpush.msra.mxu0 0.0
        %1323 = vmatpush.msra.mxu0 0.0
        %1324 = vmatpush.msra.mxu0 0.0
        %1325 = vmatpush.msra.mxu0 0.0
        %v1326 = vand.u32 %v1299, 4294901760
        %1327 = vmatpush.msra.mxu0 %v1326
        %v1328 = vand.u32 %v1295, 4294901760
        %1329 = vmatpush.msra.mxu0 %v1328
        %v1330 = vand.u32 %v1291, 4294901760
        %1331 = vmatpush.msra.mxu0 %v1330
        %v1332 = vand.u32 %v1287, 4294901760
        %1333 = vmatpush.msra.mxu0 %v1332
        %v1334 = vand.u32 %v1312, 4294901760
        %v1335 = vsub.f32 %v1312, %v1334
        %v1336 = vand.u32 %v1335, 4294901760
        %v1337 = vsub.f32 %v1335, %v1336
        %v1338 = vand.u32 %v1337, 4294901760
        %1339 = vmatmul.f32.gmra.mxu0 %v1338
        %v1340 = vpop.f32.mrf.mxu0
        %v1341 = vadd.f32 %v1308, %v1340
        %1342 = vdwg.mxu0
        %1343 = vmatpush.msra.mxu0 0.0
        %1344 = vmatpush.msra.mxu0 0.0
        %1345 = vmatpush.msra.mxu0 0.0
        %1346 = vmatpush.msra.mxu0 0.0
        %1347 = vmatpush.msra.mxu0 0.0
        %1348 = vmatpush.msra.mxu0 0.0
        %1349 = vmatpush.msra.mxu0 0.0
        %1350 = vmatpush.msra.mxu0 0.0
        %1351 = vmatpush.msra.mxu0 0.0
        %1352 = vmatpush.msra.mxu0 0.0
        %1353 = vmatpush.msra.mxu0 0.0
        %1354 = vmatpush.msra.mxu0 0.0
        %v1355 = vand.u32 %v1299, 4294901760
        %v1356 = vsub.f32 %v1299, %v1355
        %v1357 = vand.u32 %v1356, 4294901760
        %v1358 = vsub.f32 %v1356, %v1357
        %v1359 = vand.u32 %v1358, 4294901760
        %1360 = vmatpush.msra.mxu0 %v1359
        %v1361 = vand.u32 %v1295, 4294901760
        %v1362 = vsub.f32 %v1295, %v1361
        %v1363 = vand.u32 %v1362, 4294901760
        %v1364 = vsub.f32 %v1362, %v1363
        %v1365 = vand.u32 %v1364, 4294901760
        %1366 = vmatpush.msra.mxu0 %v1365
        %v1367 = vand.u32 %v1291, 4294901760
        %v1368 = vsub.f32 %v1291, %v1367
        %v1369 = vand.u32 %v1368, 4294901760
        %v1370 = vsub.f32 %v1368, %v1369
        %v1371 = vand.u32 %v1370, 4294901760
        %1372 = vmatpush.msra.mxu0 %v1371
        %v1373 = vand.u32 %v1287, 4294901760
        %v1374 = vsub.f32 %v1287, %v1373
        %v1375 = vand.u32 %v1374, 4294901760
        %v1376 = vsub.f32 %v1374, %v1375
        %v1377 = vand.u32 %v1376, 4294901760
        %1378 = vmatpush.msra.mxu0 %v1377
        %v1379 = vand.u32 %v1312, 4294901760
        %1380 = vmatmul.f32.gmra.mxu0 %v1379
        %v1381 = vpop.f32.mrf.mxu0
        %v1382 = vadd.f32 %v1341, %v1381
        %1383 = vdwg.mxu0
        %1384 = vmatpush.msra.mxu0 0.0
        %1385 = vmatpush.msra.mxu0 0.0
        %1386 = vmatpush.msra.mxu0 0.0
        %1387 = vmatpush.msra.mxu0 0.0
        %1388 = vmatpush.msra.mxu0 0.0
        %1389 = vmatpush.msra.mxu0 0.0
        %1390 = vmatpush.msra.mxu0 0.0
        %1391 = vmatpush.msra.mxu0 0.0
        %1392 = vmatpush.msra.mxu0 0.0
        %1393 = vmatpush.msra.mxu0 0.0
        %1394 = vmatpush.msra.mxu0 0.0
        %1395 = vmatpush.msra.mxu0 0.0
        %v1396 = vand.u32 %v1299, 4294901760
        %v1397 = vsub.f32 %v1299, %v1396
        %1398 = vmatpush.msra.mxu0 %v1397
        %v1399 = vand.u32 %v1295, 4294901760
        %v1400 = vsub.f32 %v1295, %v1399
        %1401 = vmatpush.msra.mxu0 %v1400
        %v1402 = vand.u32 %v1291, 4294901760
        %v1403 = vsub.f32 %v1291, %v1402
        %1404 = vmatpush.msra.mxu0 %v1403
        %v1405 = vand.u32 %v1287, 4294901760
        %v1406 = vsub.f32 %v1287, %v1405
        %1407 = vmatpush.msra.mxu0 %v1406
        %v1408 = vand.u32 %v1312, 4294901760
        %v1409 = vsub.f32 %v1312, %v1408
        %1410 = vmatmul.f32.gmra.mxu0 %v1409
        %v1411 = vpop.f32.mrf.mxu0
        %v1412 = vadd.f32 %v1382, %v1411
        %1413 = vdwg.mxu0
        %1414 = vmatpush.msra.mxu0 0.0
        %1415 = vmatpush.msra.mxu0 0.0
        %1416 = vmatpush.msra.mxu0 0.0
        %1417 = vmatpush.msra.mxu0 0.0
        %1418 = vmatpush.msra.mxu0 0.0
        %1419 = vmatpush.msra.mxu0 0.0
        %1420 = vmatpush.msra.mxu0 0.0
        %1421 = vmatpush.msra.mxu0 0.0
        %1422 = vmatpush.msra.mxu0 0.0
        %1423 = vmatpush.msra.mxu0 0.0
        %1424 = vmatpush.msra.mxu0 0.0
        %1425 = vmatpush.msra.mxu0 0.0
        %v1426 = vand.u32 %v1299, 4294901760
        %1427 = vmatpush.msra.mxu0 %v1426
        %v1428 = vand.u32 %v1295, 4294901760
        %1429 = vmatpush.msra.mxu0 %v1428
        %v1430 = vand.u32 %v1291, 4294901760
        %1431 = vmatpush.msra.mxu0 %v1430
        %v1432 = vand.u32 %v1287, 4294901760
        %1433 = vmatpush.msra.mxu0 %v1432
        %v1434 = vand.u32 %v1312, 4294901760
        %v1435 = vsub.f32 %v1312, %v1434
        %v1436 = vand.u32 %v1435, 4294901760
        %1437 = vmatmul.f32.gmra.mxu0 %v1436
        %v1438 = vpop.f32.mrf.mxu0
        %v1439 = vadd.f32 %v1412, %v1438
        %1440 = vdwg.mxu0
        %1441 = vmatpush.msra.mxu0 0.0
        %1442 = vmatpush.msra.mxu0 0.0
        %1443 = vmatpush.msra.mxu0 0.0
        %1444 = vmatpush.msra.mxu0 0.0
        %1445 = vmatpush.msra.mxu0 0.0
        %1446 = vmatpush.msra.mxu0 0.0
        %1447 = vmatpush.msra.mxu0 0.0
        %1448 = vmatpush.msra.mxu0 0.0
        %1449 = vmatpush.msra.mxu0 0.0
        %1450 = vmatpush.msra.mxu0 0.0
        %1451 = vmatpush.msra.mxu0 0.0
        %1452 = vmatpush.msra.mxu0 0.0
        %v1453 = vand.u32 %v1299, 4294901760
        %v1454 = vsub.f32 %v1299, %v1453
        %v1455 = vand.u32 %v1454, 4294901760
        %1456 = vmatpush.msra.mxu0 %v1455
        %v1457 = vand.u32 %v1295, 4294901760
        %v1458 = vsub.f32 %v1295, %v1457
        %v1459 = vand.u32 %v1458, 4294901760
        %1460 = vmatpush.msra.mxu0 %v1459
        %v1461 = vand.u32 %v1291, 4294901760
        %v1462 = vsub.f32 %v1291, %v1461
        %v1463 = vand.u32 %v1462, 4294901760
        %1464 = vmatpush.msra.mxu0 %v1463
        %v1465 = vand.u32 %v1287, 4294901760
        %v1466 = vsub.f32 %v1287, %v1465
        %v1467 = vand.u32 %v1466, 4294901760
        %1468 = vmatpush.msra.mxu0 %v1467
        %v1469 = vand.u32 %v1312, 4294901760
        %1470 = vmatmul.f32.gmra.mxu0 %v1469
        %v1471 = vpop.f32.mrf.mxu0
        %v1472 = vadd.f32 %v1439, %v1471
        %1473 = vdwg.mxu0
        %1474 = vmatpush.msra.mxu0 0.0
        %1475 = vmatpush.msra.mxu0 0.0
        %1476 = vmatpush.msra.mxu0 0.0
        %1477 = vmatpush.msra.mxu0 0.0
        %1478 = vmatpush.msra.mxu0 0.0
        %1479 = vmatpush.msra.mxu0 0.0
        %1480 = vmatpush.msra.mxu0 0.0
        %1481 = vmatpush.msra.mxu0 0.0
        %1482 = vmatpush.msra.mxu0 0.0
        %1483 = vmatpush.msra.mxu0 0.0
        %1484 = vmatpush.msra.mxu0 0.0
        %1485 = vmatpush.msra.mxu0 0.0
        %v1486 = vand.u32 %v1299, 4294901760
        %1487 = vmatpush.msra.mxu0 %v1486
        %v1488 = vand.u32 %v1295, 4294901760
        %1489 = vmatpush.msra.mxu0 %v1488
        %v1490 = vand.u32 %v1291, 4294901760
        %1491 = vmatpush.msra.mxu0 %v1490
        %v1492 = vand.u32 %v1287, 4294901760
        %1493 = vmatpush.msra.mxu0 %v1492
        %v1494 = vand.u32 %v1312, 4294901760
        %1495 = vmatmul.f32.gmra.mxu0 %v1494
        %v1496 = vpop.f32.mrf.mxu0
        %v1497 = vadd.f32 %v1472, %v1496
        %1498 = vdwg.mxu0
        %1499 = vmatpush.msra.mxu0 0.0
        %1500 = vmatpush.msra.mxu0 0.0
        %1501 = vmatpush.msra.mxu0 0.0
        %1502 = vmatpush.msra.mxu0 0.0
        %1503 = vmatpush.msra.mxu0 0.0
        %1504 = vmatpush.msra.mxu0 0.0
        %1505 = vmatpush.msra.mxu0 0.0
        %1506 = vmatpush.msra.mxu0 0.0
        %1507 = vmatpush.msra.mxu0 0.0
        %1508 = vmatpush.msra.mxu0 0.0
        %1509 = vmatpush.msra.mxu0 0.0
        %1510 = vmatpush.msra.mxu0 0.0
        %v1511 = vand.u32 %v1300, 4294901760
        %1512 = vmatpush.msra.mxu0 %v1511
        %v1513 = vand.u32 %v1296, 4294901760
        %1514 = vmatpush.msra.mxu0 %v1513
        %v1515 = vand.u32 %v1292, 4294901760
        %1516 = vmatpush.msra.mxu0 %v1515
        %v1517 = vand.u32 %v1288, 4294901760
        %1518 = vmatpush.msra.mxu0 %v1517
        %v1519 = vand.u32 %v1312, 4294901760
        %v1520 = vsub.f32 %v1312, %v1519
        %v1521 = vand.u32 %v1520, 4294901760
        %v1522 = vsub.f32 %v1520, %v1521
        %v1523 = vand.u32 %v1522, 4294901760
        %1524 = vmatmul.f32.gmra.mxu0 %v1523
        %v1525 = vpop.f32.mrf.mxu0
        %v1526 = vadd.f32 %v1308, %v1525
        %1527 = vdwg.mxu0
        %1528 = vmatpush.msra.mxu0 0.0
        %1529 = vmatpush.msra.mxu0 0.0
        %1530 = vmatpush.msra.mxu0 0.0
        %1531 = vmatpush.msra.mxu0 0.0
        %1532 = vmatpush.msra.mxu0 0.0
        %1533 = vmatpush.msra.mxu0 0.0
        %1534 = vmatpush.msra.mxu0 0.0
        %1535 = vmatpush.msra.mxu0 0.0
        %1536 = vmatpush.msra.mxu0 0.0
        %1537 = vmatpush.msra.mxu0 0.0
        %1538 = vmatpush.msra.mxu0 0.0
        %1539 = vmatpush.msra.mxu0 0.0
        %v1540 = vand.u32 %v1300, 4294901760
        %v1541 = vsub.f32 %v1300, %v1540
        %v1542 = vand.u32 %v1541, 4294901760
        %v1543 = vsub.f32 %v1541, %v1542
        %v1544 = vand.u32 %v1543, 4294901760
        %1545 = vmatpush.msra.mxu0 %v1544
        %v1546 = vand.u32 %v1296, 4294901760
        %v1547 = vsub.f32 %v1296, %v1546
        %v1548 = vand.u32 %v1547, 4294901760
        %v1549 = vsub.f32 %v1547, %v1548
        %v1550 = vand.u32 %v1549, 4294901760
        %1551 = vmatpush.msra.mxu0 %v1550
        %v1552 = vand.u32 %v1292, 4294901760
        %v1553 = vsub.f32 %v1292, %v1552
        %v1554 = vand.u32 %v1553, 4294901760
        %v1555 = vsub.f32 %v1553, %v1554
        %v1556 = vand.u32 %v1555, 4294901760
        %1557 = vmatpush.msra.mxu0 %v1556
        %v1558 = vand.u32 %v1288, 4294901760
        %v1559 = vsub.f32 %v1288, %v1558
        %v1560 = vand.u32 %v1559, 4294901760
        %v1561 = vsub.f32 %v1559, %v1560
        %v1562 = vand.u32 %v1561, 4294901760
        %1563 = vmatpush.msra.mxu0 %v1562
        %v1564 = vand.u32 %v1312, 4294901760
        %1565 = vmatmul.f32.gmra.mxu0 %v1564
        %v1566 = vpop.f32.mrf.mxu0
        %v1567 = vadd.f32 %v1526, %v1566
        %1568 = vdwg.mxu0
        %1569 = vmatpush.msra.mxu0 0.0
        %1570 = vmatpush.msra.mxu0 0.0
        %1571 = vmatpush.msra.mxu0 0.0
        %1572 = vmatpush.msra.mxu0 0.0
        %1573 = vmatpush.msra.mxu0 0.0
        %1574 = vmatpush.msra.mxu0 0.0
        %1575 = vmatpush.msra.mxu0 0.0
        %1576 = vmatpush.msra.mxu0 0.0
        %1577 = vmatpush.msra.mxu0 0.0
        %1578 = vmatpush.msra.mxu0 0.0
        %1579 = vmatpush.msra.mxu0 0.0
        %1580 = vmatpush.msra.mxu0 0.0
        %v1581 = vand.u32 %v1300, 4294901760
        %v1582 = vsub.f32 %v1300, %v1581
        %1583 = vmatpush.msra.mxu0 %v1582
        %v1584 = vand.u32 %v1296, 4294901760
        %v1585 = vsub.f32 %v1296, %v1584
        %1586 = vmatpush.msra.mxu0 %v1585
        %v1587 = vand.u32 %v1292, 4294901760
        %v1588 = vsub.f32 %v1292, %v1587
        %1589 = vmatpush.msra.mxu0 %v1588
        %v1590 = vand.u32 %v1288, 4294901760
        %v1591 = vsub.f32 %v1288, %v1590
        %1592 = vmatpush.msra.mxu0 %v1591
        %v1593 = vand.u32 %v1312, 4294901760
        %v1594 = vsub.f32 %v1312, %v1593
        %1595 = vmatmul.f32.gmra.mxu0 %v1594
        %v1596 = vpop.f32.mrf.mxu0
        %v1597 = vadd.f32 %v1567, %v1596
        %1598 = vdwg.mxu0
        %1599 = vmatpush.msra.mxu0 0.0
        %1600 = vmatpush.msra.mxu0 0.0
        %1601 = vmatpush.msra.mxu0 0.0
        %1602 = vmatpush.msra.mxu0 0.0
        %1603 = vmatpush.msra.mxu0 0.0
        %1604 = vmatpush.msra.mxu0 0.0
        %1605 = vmatpush.msra.mxu0 0.0
        %1606 = vmatpush.msra.mxu0 0.0
        %1607 = vmatpush.msra.mxu0 0.0
        %1608 = vmatpush.msra.mxu0 0.0
        %1609 = vmatpush.msra.mxu0 0.0
        %1610 = vmatpush.msra.mxu0 0.0
        %v1611 = vand.u32 %v1300, 4294901760
        %1612 = vmatpush.msra.mxu0 %v1611
        %v1613 = vand.u32 %v1296, 4294901760
        %1614 = vmatpush.msra.mxu0 %v1613
        %v1615 = vand.u32 %v1292, 4294901760
        %1616 = vmatpush.msra.mxu0 %v1615
        %v1617 = vand.u32 %v1288, 4294901760
        %1618 = vmatpush.msra.mxu0 %v1617
        %v1619 = vand.u32 %v1312, 4294901760
        %v1620 = vsub.f32 %v1312, %v1619
        %v1621 = vand.u32 %v1620, 4294901760
        %1622 = vmatmul.f32.gmra.mxu0 %v1621
        %v1623 = vpop.f32.mrf.mxu0
        %v1624 = vadd.f32 %v1597, %v1623
        %1625 = vdwg.mxu0
        %1626 = vmatpush.msra.mxu0 0.0
        %1627 = vmatpush.msra.mxu0 0.0
        %1628 = vmatpush.msra.mxu0 0.0
        %1629 = vmatpush.msra.mxu0 0.0
        %1630 = vmatpush.msra.mxu0 0.0
        %1631 = vmatpush.msra.mxu0 0.0
        %1632 = vmatpush.msra.mxu0 0.0
        %1633 = vmatpush.msra.mxu0 0.0
        %1634 = vmatpush.msra.mxu0 0.0
        %1635 = vmatpush.msra.mxu0 0.0
        %1636 = vmatpush.msra.mxu0 0.0
        %1637 = vmatpush.msra.mxu0 0.0
        %v1638 = vand.u32 %v1300, 4294901760
        %v1639 = vsub.f32 %v1300, %v1638
        %v1640 = vand.u32 %v1639, 4294901760
        %1641 = vmatpush.msra.mxu0 %v1640
        %v1642 = vand.u32 %v1296, 4294901760
        %v1643 = vsub.f32 %v1296, %v1642
        %v1644 = vand.u32 %v1643, 4294901760
        %1645 = vmatpush.msra.mxu0 %v1644
        %v1646 = vand.u32 %v1292, 4294901760
        %v1647 = vsub.f32 %v1292, %v1646
        %v1648 = vand.u32 %v1647, 4294901760
        %1649 = vmatpush.msra.mxu0 %v1648
        %v1650 = vand.u32 %v1288, 4294901760
        %v1651 = vsub.f32 %v1288, %v1650
        %v1652 = vand.u32 %v1651, 4294901760
        %1653 = vmatpush.msra.mxu0 %v1652
        %v1654 = vand.u32 %v1312, 4294901760
        %1655 = vmatmul.f32.gmra.mxu0 %v1654
        %v1656 = vpop.f32.mrf.mxu0
        %v1657 = vadd.f32 %v1624, %v1656
        %1658 = vdwg.mxu0
        %1659 = vmatpush.msra.mxu0 0.0
        %1660 = vmatpush.msra.mxu0 0.0
        %1661 = vmatpush.msra.mxu0 0.0
        %1662 = vmatpush.msra.mxu0 0.0
        %1663 = vmatpush.msra.mxu0 0.0
        %1664 = vmatpush.msra.mxu0 0.0
        %1665 = vmatpush.msra.mxu0 0.0
        %1666 = vmatpush.msra.mxu0 0.0
        %1667 = vmatpush.msra.mxu0 0.0
        %1668 = vmatpush.msra.mxu0 0.0
        %1669 = vmatpush.msra.mxu0 0.0
        %1670 = vmatpush.msra.mxu0 0.0
        %v1671 = vand.u32 %v1300, 4294901760
        %1672 = vmatpush.msra.mxu0 %v1671
        %v1673 = vand.u32 %v1296, 4294901760
        %1674 = vmatpush.msra.mxu0 %v1673
        %v1675 = vand.u32 %v1292, 4294901760
        %1676 = vmatpush.msra.mxu0 %v1675
        %v1677 = vand.u32 %v1288, 4294901760
        %1678 = vmatpush.msra.mxu0 %v1677
        %v1679 = vand.u32 %v1312, 4294901760
        %1680 = vmatmul.f32.gmra.mxu0 %v1679
        %v1681 = vpop.f32.mrf.mxu0
        %v1682 = vadd.f32 %v1657, %v1681
        %1683 = vdwg.mxu0
        %1684 = vmatpush.msra.mxu0 0.0
        %1685 = vmatpush.msra.mxu0 0.0
        %1686 = vmatpush.msra.mxu0 0.0
        %1687 = vmatpush.msra.mxu0 0.0
        %1688 = vmatpush.msra.mxu0 0.0
        %1689 = vmatpush.msra.mxu0 0.0
        %1690 = vmatpush.msra.mxu0 0.0
        %1691 = vmatpush.msra.mxu0 0.0
        %1692 = vmatpush.msra.mxu0 0.0
        %1693 = vmatpush.msra.mxu0 0.0
        %1694 = vmatpush.msra.mxu0 0.0
        %1695 = vmatpush.msra.mxu0 0.0
        %v1696 = vand.u32 %v1301, 4294901760
        %1697 = vmatpush.msra.mxu0 %v1696
        %v1698 = vand.u32 %v1297, 4294901760
        %1699 = vmatpush.msra.mxu0 %v1698
        %v1700 = vand.u32 %v1293, 4294901760
        %1701 = vmatpush.msra.mxu0 %v1700
        %v1702 = vand.u32 %v1289, 4294901760
        %1703 = vmatpush.msra.mxu0 %v1702
        %v1704 = vand.u32 %v1312, 4294901760
        %v1705 = vsub.f32 %v1312, %v1704
        %v1706 = vand.u32 %v1705, 4294901760
        %v1707 = vsub.f32 %v1705, %v1706
        %v1708 = vand.u32 %v1707, 4294901760
        %1709 = vmatmul.f32.gmra.mxu0 %v1708
        %v1710 = vpop.f32.mrf.mxu0
        %v1711 = vadd.f32 %v1308, %v1710
        %1712 = vdwg.mxu0
        %1713 = vmatpush.msra.mxu0 0.0
        %1714 = vmatpush.msra.mxu0 0.0
        %1715 = vmatpush.msra.mxu0 0.0
        %1716 = vmatpush.msra.mxu0 0.0
        %1717 = vmatpush.msra.mxu0 0.0
        %1718 = vmatpush.msra.mxu0 0.0
        %1719 = vmatpush.msra.mxu0 0.0
        %1720 = vmatpush.msra.mxu0 0.0
        %1721 = vmatpush.msra.mxu0 0.0
        %1722 = vmatpush.msra.mxu0 0.0
        %1723 = vmatpush.msra.mxu0 0.0
        %1724 = vmatpush.msra.mxu0 0.0
        %v1725 = vand.u32 %v1301, 4294901760
        %v1726 = vsub.f32 %v1301, %v1725
        %v1727 = vand.u32 %v1726, 4294901760
        %v1728 = vsub.f32 %v1726, %v1727
        %v1729 = vand.u32 %v1728, 4294901760
        %1730 = vmatpush.msra.mxu0 %v1729
        %v1731 = vand.u32 %v1297, 4294901760
        %v1732 = vsub.f32 %v1297, %v1731
        %v1733 = vand.u32 %v1732, 4294901760
        %v1734 = vsub.f32 %v1732, %v1733
        %v1735 = vand.u32 %v1734, 4294901760
        %1736 = vmatpush.msra.mxu0 %v1735
        %v1737 = vand.u32 %v1293, 4294901760
        %v1738 = vsub.f32 %v1293, %v1737
        %v1739 = vand.u32 %v1738, 4294901760
        %v1740 = vsub.f32 %v1738, %v1739
        %v1741 = vand.u32 %v1740, 4294901760
        %1742 = vmatpush.msra.mxu0 %v1741
        %v1743 = vand.u32 %v1289, 4294901760
        %v1744 = vsub.f32 %v1289, %v1743
        %v1745 = vand.u32 %v1744, 4294901760
        %v1746 = vsub.f32 %v1744, %v1745
        %v1747 = vand.u32 %v1746, 4294901760
        %1748 = vmatpush.msra.mxu0 %v1747
        %v1749 = vand.u32 %v1312, 4294901760
        %1750 = vmatmul.f32.gmra.mxu0 %v1749
        %v1751 = vpop.f32.mrf.mxu0
        %v1752 = vadd.f32 %v1711, %v1751
        %1753 = vdwg.mxu0
        %1754 = vmatpush.msra.mxu0 0.0
        %1755 = vmatpush.msra.mxu0 0.0
        %1756 = vmatpush.msra.mxu0 0.0
        %1757 = vmatpush.msra.mxu0 0.0
        %1758 = vmatpush.msra.mxu0 0.0
        %1759 = vmatpush.msra.mxu0 0.0
        %1760 = vmatpush.msra.mxu0 0.0
        %1761 = vmatpush.msra.mxu0 0.0
        %1762 = vmatpush.msra.mxu0 0.0
        %1763 = vmatpush.msra.mxu0 0.0
        %1764 = vmatpush.msra.mxu0 0.0
        %1765 = vmatpush.msra.mxu0 0.0
        %v1766 = vand.u32 %v1301, 4294901760
        %v1767 = vsub.f32 %v1301, %v1766
        %1768 = vmatpush.msra.mxu0 %v1767
        %v1769 = vand.u32 %v1297, 4294901760
        %v1770 = vsub.f32 %v1297, %v1769
        %1771 = vmatpush.msra.mxu0 %v1770
        %v1772 = vand.u32 %v1293, 4294901760
        %v1773 = vsub.f32 %v1293, %v1772
        %1774 = vmatpush.msra.mxu0 %v1773
        %v1775 = vand.u32 %v1289, 4294901760
        %v1776 = vsub.f32 %v1289, %v1775
        %1777 = vmatpush.msra.mxu0 %v1776
        %v1778 = vand.u32 %v1312, 4294901760
        %v1779 = vsub.f32 %v1312, %v1778
        %1780 = vmatmul.f32.gmra.mxu0 %v1779
        %v1781 = vpop.f32.mrf.mxu0
        %v1782 = vadd.f32 %v1752, %v1781
        %1783 = vdwg.mxu0
        %1784 = vmatpush.msra.mxu0 0.0
        %1785 = vmatpush.msra.mxu0 0.0
        %1786 = vmatpush.msra.mxu0 0.0
        %1787 = vmatpush.msra.mxu0 0.0
        %1788 = vmatpush.msra.mxu0 0.0
        %1789 = vmatpush.msra.mxu0 0.0
        %1790 = vmatpush.msra.mxu0 0.0
        %1791 = vmatpush.msra.mxu0 0.0
        %1792 = vmatpush.msra.mxu0 0.0
        %1793 = vmatpush.msra.mxu0 0.0
        %1794 = vmatpush.msra.mxu0 0.0
        %1795 = vmatpush.msra.mxu0 0.0
        %v1796 = vand.u32 %v1301, 4294901760
        %1797 = vmatpush.msra.mxu0 %v1796
        %v1798 = vand.u32 %v1297, 4294901760
        %1799 = vmatpush.msra.mxu0 %v1798
        %v1800 = vand.u32 %v1293, 4294901760
        %1801 = vmatpush.msra.mxu0 %v1800
        %v1802 = vand.u32 %v1289, 4294901760
        %1803 = vmatpush.msra.mxu0 %v1802
        %v1804 = vand.u32 %v1312, 4294901760
        %v1805 = vsub.f32 %v1312, %v1804
        %v1806 = vand.u32 %v1805, 4294901760
        %1807 = vmatmul.f32.gmra.mxu0 %v1806
        %v1808 = vpop.f32.mrf.mxu0
        %v1809 = vadd.f32 %v1782, %v1808
        %1810 = vdwg.mxu0
        %1811 = vmatpush.msra.mxu0 0.0
        %1812 = vmatpush.msra.mxu0 0.0
        %1813 = vmatpush.msra.mxu0 0.0
        %1814 = vmatpush.msra.mxu0 0.0
        %1815 = vmatpush.msra.mxu0 0.0
        %1816 = vmatpush.msra.mxu0 0.0
        %1817 = vmatpush.msra.mxu0 0.0
        %1818 = vmatpush.msra.mxu0 0.0
        %1819 = vmatpush.msra.mxu0 0.0
        %1820 = vmatpush.msra.mxu0 0.0
        %1821 = vmatpush.msra.mxu0 0.0
        %1822 = vmatpush.msra.mxu0 0.0
        %v1823 = vand.u32 %v1301, 4294901760
        %v1824 = vsub.f32 %v1301, %v1823
        %v1825 = vand.u32 %v1824, 4294901760
        %1826 = vmatpush.msra.mxu0 %v1825
        %v1827 = vand.u32 %v1297, 4294901760
        %v1828 = vsub.f32 %v1297, %v1827
        %v1829 = vand.u32 %v1828, 4294901760
        %1830 = vmatpush.msra.mxu0 %v1829
        %v1831 = vand.u32 %v1293, 4294901760
        %v1832 = vsub.f32 %v1293, %v1831
        %v1833 = vand.u32 %v1832, 4294901760
        %1834 = vmatpush.msra.mxu0 %v1833
        %v1835 = vand.u32 %v1289, 4294901760
        %v1836 = vsub.f32 %v1289, %v1835
        %v1837 = vand.u32 %v1836, 4294901760
        %1838 = vmatpush.msra.mxu0 %v1837
        %v1839 = vand.u32 %v1312, 4294901760
        %1840 = vmatmul.f32.gmra.mxu0 %v1839
        %v1841 = vpop.f32.mrf.mxu0
        %v1842 = vadd.f32 %v1809, %v1841
        %1843 = vdwg.mxu0
        %1844 = vmatpush.msra.mxu0 0.0
        %1845 = vmatpush.msra.mxu0 0.0
        %1846 = vmatpush.msra.mxu0 0.0
        %1847 = vmatpush.msra.mxu0 0.0
        %1848 = vmatpush.msra.mxu0 0.0
        %1849 = vmatpush.msra.mxu0 0.0
        %1850 = vmatpush.msra.mxu0 0.0
        %1851 = vmatpush.msra.mxu0 0.0
        %1852 = vmatpush.msra.mxu0 0.0
        %1853 = vmatpush.msra.mxu0 0.0
        %1854 = vmatpush.msra.mxu0 0.0
        %1855 = vmatpush.msra.mxu0 0.0
        %v1856 = vand.u32 %v1301, 4294901760
        %1857 = vmatpush.msra.mxu0 %v1856
        %v1858 = vand.u32 %v1297, 4294901760
        %1859 = vmatpush.msra.mxu0 %v1858
        %v1860 = vand.u32 %v1293, 4294901760
        %1861 = vmatpush.msra.mxu0 %v1860
        %v1862 = vand.u32 %v1289, 4294901760
        %1863 = vmatpush.msra.mxu0 %v1862
        %v1864 = vand.u32 %v1312, 4294901760
        %1865 = vmatmul.f32.gmra.mxu0 %v1864
        %v1866 = vpop.f32.mrf.mxu0
        %v1867 = vadd.f32 %v1842, %v1866
        %1868 = vdwg.mxu0
        %1869 = vmatpush.msra.mxu0 0.0
        %1870 = vmatpush.msra.mxu0 0.0
        %1871 = vmatpush.msra.mxu0 0.0
        %1872 = vmatpush.msra.mxu0 0.0
        %1873 = vmatpush.msra.mxu0 0.0
        %1874 = vmatpush.msra.mxu0 0.0
        %1875 = vmatpush.msra.mxu0 0.0
        %1876 = vmatpush.msra.mxu0 0.0
        %1877 = vmatpush.msra.mxu0 0.0
        %1878 = vmatpush.msra.mxu0 0.0
        %1879 = vmatpush.msra.mxu0 0.0
        %1880 = vmatpush.msra.mxu0 0.0
        %v1881 = vand.u32 %v1302, 4294901760
        %1882 = vmatpush.msra.mxu0 %v1881
        %v1883 = vand.u32 %v1298, 4294901760
        %1884 = vmatpush.msra.mxu0 %v1883
        %v1885 = vand.u32 %v1294, 4294901760
        %1886 = vmatpush.msra.mxu0 %v1885
        %v1887 = vand.u32 %v1290, 4294901760
        %1888 = vmatpush.msra.mxu0 %v1887
        %v1889 = vand.u32 %v1312, 4294901760
        %v1890 = vsub.f32 %v1312, %v1889
        %v1891 = vand.u32 %v1890, 4294901760
        %v1892 = vsub.f32 %v1890, %v1891
        %v1893 = vand.u32 %v1892, 4294901760
        %1894 = vmatmul.f32.gmra.mxu0 %v1893
        %v1895 = vpop.f32.mrf.mxu0
        %v1896 = vadd.f32 %v1308, %v1895
        %1897 = vdwg.mxu0
        %1898 = vmatpush.msra.mxu0 0.0
        %1899 = vmatpush.msra.mxu0 0.0
        %1900 = vmatpush.msra.mxu0 0.0
        %1901 = vmatpush.msra.mxu0 0.0
        %1902 = vmatpush.msra.mxu0 0.0
        %1903 = vmatpush.msra.mxu0 0.0
        %1904 = vmatpush.msra.mxu0 0.0
        %1905 = vmatpush.msra.mxu0 0.0
        %1906 = vmatpush.msra.mxu0 0.0
        %1907 = vmatpush.msra.mxu0 0.0
        %1908 = vmatpush.msra.mxu0 0.0
        %1909 = vmatpush.msra.mxu0 0.0
        %v1910 = vand.u32 %v1302, 4294901760
        %v1911 = vsub.f32 %v1302, %v1910
        %v1912 = vand.u32 %v1911, 4294901760
        %v1913 = vsub.f32 %v1911, %v1912
        %v1914 = vand.u32 %v1913, 4294901760
        %1915 = vmatpush.msra.mxu0 %v1914
        %v1916 = vand.u32 %v1298, 4294901760
        %v1917 = vsub.f32 %v1298, %v1916
        %v1918 = vand.u32 %v1917, 4294901760
        %v1919 = vsub.f32 %v1917, %v1918
        %v1920 = vand.u32 %v1919, 4294901760
        %1921 = vmatpush.msra.mxu0 %v1920
        %v1922 = vand.u32 %v1294, 4294901760
        %v1923 = vsub.f32 %v1294, %v1922
        %v1924 = vand.u32 %v1923, 4294901760
        %v1925 = vsub.f32 %v1923, %v1924
        %v1926 = vand.u32 %v1925, 4294901760
        %1927 = vmatpush.msra.mxu0 %v1926
        %v1928 = vand.u32 %v1290, 4294901760
        %v1929 = vsub.f32 %v1290, %v1928
        %v1930 = vand.u32 %v1929, 4294901760
        %v1931 = vsub.f32 %v1929, %v1930
        %v1932 = vand.u32 %v1931, 4294901760
        %1933 = vmatpush.msra.mxu0 %v1932
        %v1934 = vand.u32 %v1312, 4294901760
        %1935 = vmatmul.f32.gmra.mxu0 %v1934
        %v1936 = vpop.f32.mrf.mxu0
        %v1937 = vadd.f32 %v1896, %v1936
        %1938 = vdwg.mxu0
        %1939 = vmatpush.msra.mxu0 0.0
        %1940 = vmatpush.msra.mxu0 0.0
        %1941 = vmatpush.msra.mxu0 0.0
        %1942 = vmatpush.msra.mxu0 0.0
        %1943 = vmatpush.msra.mxu0 0.0
        %1944 = vmatpush.msra.mxu0 0.0
        %1945 = vmatpush.msra.mxu0 0.0
        %1946 = vmatpush.msra.mxu0 0.0
        %1947 = vmatpush.msra.mxu0 0.0
        %1948 = vmatpush.msra.mxu0 0.0
        %1949 = vmatpush.msra.mxu0 0.0
        %1950 = vmatpush.msra.mxu0 0.0
        %v1951 = vand.u32 %v1302, 4294901760
        %v1952 = vsub.f32 %v1302, %v1951
        %1953 = vmatpush.msra.mxu0 %v1952
        %v1954 = vand.u32 %v1298, 4294901760
        %v1955 = vsub.f32 %v1298, %v1954
        %1956 = vmatpush.msra.mxu0 %v1955
        %v1957 = vand.u32 %v1294, 4294901760
        %v1958 = vsub.f32 %v1294, %v1957
        %1959 = vmatpush.msra.mxu0 %v1958
        %v1960 = vand.u32 %v1290, 4294901760
        %v1961 = vsub.f32 %v1290, %v1960
        %1962 = vmatpush.msra.mxu0 %v1961
        %v1963 = vand.u32 %v1312, 4294901760
        %v1964 = vsub.f32 %v1312, %v1963
        %1965 = vmatmul.f32.gmra.mxu0 %v1964
        %v1966 = vpop.f32.mrf.mxu0
        %v1967 = vadd.f32 %v1937, %v1966
        %1968 = vdwg.mxu0
        %1969 = vmatpush.msra.mxu0 0.0
        %1970 = vmatpush.msra.mxu0 0.0
        %1971 = vmatpush.msra.mxu0 0.0
        %1972 = vmatpush.msra.mxu0 0.0
        %1973 = vmatpush.msra.mxu0 0.0
        %1974 = vmatpush.msra.mxu0 0.0
        %1975 = vmatpush.msra.mxu0 0.0
        %1976 = vmatpush.msra.mxu0 0.0
        %1977 = vmatpush.msra.mxu0 0.0
        %1978 = vmatpush.msra.mxu0 0.0
        %1979 = vmatpush.msra.mxu0 0.0
        %1980 = vmatpush.msra.mxu0 0.0
        %v1981 = vand.u32 %v1302, 4294901760
        %1982 = vmatpush.msra.mxu0 %v1981
        %v1983 = vand.u32 %v1298, 4294901760
        %1984 = vmatpush.msra.mxu0 %v1983
        %v1985 = vand.u32 %v1294, 4294901760
        %1986 = vmatpush.msra.mxu0 %v1985
        %v1987 = vand.u32 %v1290, 4294901760
        %1988 = vmatpush.msra.mxu0 %v1987
        %v1989 = vand.u32 %v1312, 4294901760
        %v1990 = vsub.f32 %v1312, %v1989
        %v1991 = vand.u32 %v1990, 4294901760
        %1992 = vmatmul.f32.gmra.mxu0 %v1991
        %v1993 = vpop.f32.mrf.mxu0
        %v1994 = vadd.f32 %v1967, %v1993
        %1995 = vdwg.mxu0
        %1996 = vmatpush.msra.mxu0 0.0
        %1997 = vmatpush.msra.mxu0 0.0
        %1998 = vmatpush.msra.mxu0 0.0
        %1999 = vmatpush.msra.mxu0 0.0
        %2000 = vmatpush.msra.mxu0 0.0
        %2001 = vmatpush.msra.mxu0 0.0
        %2002 = vmatpush.msra.mxu0 0.0
        %2003 = vmatpush.msra.mxu0 0.0
        %2004 = vmatpush.msra.mxu0 0.0
        %2005 = vmatpush.msra.mxu0 0.0
        %2006 = vmatpush.msra.mxu0 0.0
        %2007 = vmatpush.msra.mxu0 0.0
        %v2008 = vand.u32 %v1302, 4294901760
        %v2009 = vsub.f32 %v1302, %v2008
        %v2010 = vand.u32 %v2009, 4294901760
        %2011 = vmatpush.msra.mxu0 %v2010
        %v2012 = vand.u32 %v1298, 4294901760
        %v2013 = vsub.f32 %v1298, %v2012
        %v2014 = vand.u32 %v2013, 4294901760
        %2015 = vmatpush.msra.mxu0 %v2014
        %v2016 = vand.u32 %v1294, 4294901760
        %v2017 = vsub.f32 %v1294, %v2016
        %v2018 = vand.u32 %v2017, 4294901760
        %2019 = vmatpush.msra.mxu0 %v2018
        %v2020 = vand.u32 %v1290, 4294901760
        %v2021 = vsub.f32 %v1290, %v2020
        %v2022 = vand.u32 %v2021, 4294901760
        %2023 = vmatpush.msra.mxu0 %v2022
        %v2024 = vand.u32 %v1312, 4294901760
        %2025 = vmatmul.f32.gmra.mxu0 %v2024
        %v2026 = vpop.f32.mrf.mxu0
        %v2027 = vadd.f32 %v1994, %v2026
        %2028 = vdwg.mxu0
        %2029 = vmatpush.msra.mxu0 0.0
        %2030 = vmatpush.msra.mxu0 0.0
        %2031 = vmatpush.msra.mxu0 0.0
        %2032 = vmatpush.msra.mxu0 0.0
        %2033 = vmatpush.msra.mxu0 0.0
        %2034 = vmatpush.msra.mxu0 0.0
        %2035 = vmatpush.msra.mxu0 0.0
        %2036 = vmatpush.msra.mxu0 0.0
        %2037 = vmatpush.msra.mxu0 0.0
        %2038 = vmatpush.msra.mxu0 0.0
        %2039 = vmatpush.msra.mxu0 0.0
        %2040 = vmatpush.msra.mxu0 0.0
        %v2041 = vand.u32 %v1302, 4294901760
        %2042 = vmatpush.msra.mxu0 %v2041
        %v2043 = vand.u32 %v1298, 4294901760
        %2044 = vmatpush.msra.mxu0 %v2043
        %v2045 = vand.u32 %v1294, 4294901760
        %2046 = vmatpush.msra.mxu0 %v2045
        %v2047 = vand.u32 %v1290, 4294901760
        %2048 = vmatpush.msra.mxu0 %v2047
        %v2049 = vand.u32 %v1312, 4294901760
        %2050 = vmatmul.f32.gmra.mxu0 %v2049
        %v2051 = vpop.f32.mrf.mxu0
        %v2052 = vadd.f32 %v2027, %v2051
        %2053 = vdwg.mxu0
        %v2054 = vmul.f32 %v1497, 0.5
        %v2055 = vmul.f32 %v1682, 0.5
        %v2056 = vmul.f32 %v1867, 0.5
        %v2057 = vmul.f32 %v2052, 0.5
        %v2058 = vtanh.pop %v2054
        %v2059 = vtanh.pop %v2055
        %v2060 = vtanh.pop %v2056
        %v2061 = vtanh.pop %v2057
        %v2062 = vadd.f32 %v2058, 1.0
        %v2063 = vadd.f32 %v2059, 1.0
        %v2064 = vadd.f32 %v2060, 1.0
        %v2065 = vadd.f32 %v2061, 1.0
        %v2066 = vmul.f32 %v2062, 0.5
        %v2067 = vmul.f32 %v2063, 0.5
        %v2068 = vmul.f32 %v2064, 0.5
        %v2069 = vmul.f32 %v2065, 0.5
        %v2074 = vrot.slane %v2067, 6
        %v2075 = vrot.slane %v2068, 4
        %v2076 = vrot.slane %v2069, 2
        %v2077 = vsel %vm274, %v2066, %v2074
        %vm2078 = vcmask 1045508
        %v2079 = vsel %vm2078, %v2075, %v2076
        %vm2080 = vcmask 1043456
        %v2081 = vsel %vm2080, %v2077, %v2079
        %2083 = vst [vmem:[%s218] sm:$0xff] %v2081
        %s2084 = sand.u32 %s137, 1
        %s2085 = scalar_lea.sflag [#allocation3], %s2084
        %s2086 = sand.u32 %s137, 1
        %s2087 = smul.addr %s2086, 8
        %s2088 = scalar_lea.vmem [#allocation2], %s2087
        // Predicated region
        $region41: #{tpu_custom_call.1} parent=39 // pred_check
          %p2089 = pneg %p147
        $region42: #{tpu_custom_call.1} parent=39 // pred_check_branch
          %2091 = sbr.rel (%p2089) target = $region44
        $region43: #{tpu_custom_call.1} parent=39 // pred_region
          %s2092 = smul.u32 4, %s19
          %2094 = vsyncadd %s2085, 0
          %s2095 = smul.addr %s2092, 2
          %s2096 = scalar_lea.hbm %s5, %s2095
          %s2098 = sshll.u32 %s2088, 4
          %s2099 = int_to_ptr.vmem [resolvable:$true] %s2098
          %s2100 = sshll.u32 %s2096, 4
          %s2101 = int_to_ptr.hbm [resolvable:$true] %s2100
          %2103 = dma.vmem_to_hbm [thread:$0]  %s2099, 128, %s2101, %s2085
        $region44: #{tpu_custom_call.1} parent=39 // pred_fallthru
          _
      $region40: #{tpu_custom_call.1} parent=5 // pred_fallthru
        _
      %p2104 = scmp.le.s32.totalorder 2, %s14
      // Predicated region
      $region45: #{tpu_custom_call.1} parent=5 // pred_check
        %p2105 = pneg %p2104
      $region46: #{tpu_custom_call.1} parent=5 // pred_check_branch
        %2107 = sbr.rel (%p2105) target = $region48
      $region47: #{tpu_custom_call.1} parent=5 // pred_region
        %s2108 = ssub.s32 %s14, 2
        // Predicated region
        $region49: #{tpu_custom_call.1} parent=47 // pred_check
          %p2109 = pneg %p153
        $region50: #{tpu_custom_call.1} parent=47 // pred_check_branch
          %2111 = sbr.rel (%p2109) target = $region52
        $region51: #{tpu_custom_call.1} parent=47 // pred_region
          %s2112 = sand.u32 %s138, 1
          %s2113 = scalar_lea.sflag [#allocation3], %s2112
          %s2114 = sand.u32 %s138, 1
          %s2115 = smul.addr %s2114, 8
          %s2116 = scalar_lea.vmem [#allocation2], %s2115
          %2118 = dma.done %s2113, 128
        $region52: #{tpu_custom_call.1} parent=47 // pred_fallthru
          _
      $region48: #{tpu_custom_call.1} parent=5 // pred_fallthru
        _
    $region6: #{tpu_custom_call.1} parent=1 // loop_footer
      %s18 = sadd.s32 1, %s14
    $region7: #{tpu_custom_call.1} parent=1 // loop_footer_branch
      %13 = sbr.rel target = $region3
    $region8: #{tpu_custom_call.1} parent=1 // loop_exit
      _
    %2119 = vsyncpa [#allocation3], 1
    %s2120 = scalar_lea.sflag [#allocation3], 1
    %2121 = vsyncpa %s2120, 1

</llo_original>
